<compile_context>
chip_gen: v5e
topology: v5e:2x2
jax: 0.10.0
libtpu: 0.0.40
codegen_flags: <defaults>
</compile_context>

<pallas_src>
import jax
import jax.numpy as jnp
import numpy as np
from jax.experimental import pallas as pl
from jax.experimental.pallas import tpu as pltpu

NUM_NODES = 8      # nodes per graph (from the module's edge_index / x)
IN_F = 3           # input features
IN_F_PAD = 8       # features padded to a tile-friendly width
HID = 16           # hidden width (= fused head width: 7 + pad + 7 + pad)
NUM_CLASSES = 7
HALF = HID // 2    # head2 column offset


def gnn_kernel(a_ref, x_ref, p_ref, out_ref):
    a = a_ref[0]                      # [M, M]  block-diagonal normalized adjacency
    x = x_ref[0]                      # [M, 8]  stacked, feature-padded node features
    gb = out_ref.shape[1]             # graphs in this block
    m = a.shape[0]                    # gb * NUM_NODES

    # Packed parameter slab [48, 16]:
    w1 = p_ref[0:8, :]                # [8, 16]  conv1 weight (rows 3:8 are zero pad)
    b1 = p_ref[8:9, :]                # [1, 16]  conv1 bias
    b2 = p_ref[9:10, :]               # [1, 16]  conv2 bias
    bh = p_ref[10:11, :]              # [1, 16]  fused head bias (cols 0:7 / 8:15)
    w2 = p_ref[16:32, :]              # [16, 16] conv2 weight
    wh = p_ref[32:48, :]              # [16, 16] fused head weights (cols 0:7 / 8:15)

    # GCNConv1: relu((A_bd @ X) @ W1 + b1)  -- one big MXU matmul per contraction
    ax = jnp.dot(a, x, preferred_element_type=jnp.float32)                      # [M, 8]
    h = jnp.maximum(jnp.dot(ax, w1, preferred_element_type=jnp.float32) + b1, 0.0)

    # GCNConv2: relu((A_bd @ H) @ W2 + b2)
    ah = jnp.dot(a, h, preferred_element_type=jnp.float32)                      # [M, 16]
    h = jnp.maximum(jnp.dot(ah, w2, preferred_element_type=jnp.float32) + b2, 0.0)

    # global_add_pool for all gb graphs at once: block-ones pooling matrix on MXU.
    gidx = jax.lax.broadcasted_iota(jnp.int32, (gb, m), 0)
    nidx = jax.lax.broadcasted_iota(jnp.int32, (gb, m), 1)
    rel = nidx - gidx * NUM_NODES
    pool = ((rel >= 0) & (rel < NUM_NODES)).astype(jnp.float32)                 # [gb, M]
    pooled = jnp.dot(pool, h, preferred_element_type=jnp.float32)               # [gb, 16]

    # Fused heads: single matmul, head1 in cols 0:7, head2 in cols 8:15.
    o = jnp.dot(pooled, wh, preferred_element_type=jnp.float32) + bh            # [gb, 16]

    # Two masked log_softmaxes computed in-place on the 16-lane layout
    # (no lane-offset slicing, no concatenation).
    col = jax.lax.broadcasted_iota(jnp.int32, (1, HID), 1)
    valid = (col % HALF) < NUM_CLASSES          # lanes 7 and 15 are padding
    half2 = col >= HALF                         # head selector

    o_m = jnp.where(valid, o, -jnp.inf)
    m1 = jnp.max(jnp.where(half2, -jnp.inf, o_m), axis=1, keepdims=True)        # [gb, 1]
    m2 = jnp.max(jnp.where(half2, o_m, -jnp.inf), axis=1, keepdims=True)        # [gb, 1]
    mx = jnp.where(half2, m2, m1)                                               # [gb, 16]
    e = jnp.where(valid, jnp.exp(o - mx), 0.0)
    s1 = jnp.sum(jnp.where(half2, 0.0, e), axis=1, keepdims=True)
    s2 = jnp.sum(jnp.where(half2, e, 0.0), axis=1, keepdims=True)
    ls = jnp.where(half2, jnp.log(s2), jnp.log(s1))
    lo = jnp.where(valid, o - mx - ls, 0.0)                                     # [gb, 16]

    out_ref[0] = lo


def build_normalized_adj(adj):
    """Dense A_hat = D^{-1/2}(A + I)D^{-1/2}, matching PyG GCNConv defaults."""
    n = adj.shape[0]
    a = np.asarray(adj, dtype=np.float32) + np.eye(n, dtype=np.float32)
    d_inv_sqrt = 1.0 / np.sqrt(a.sum(axis=1))
    return (d_inv_sqrt[:, None] * a * d_inv_sqrt[None, :]).astype(np.float32)


def pack_params(w1, b1, w2, b2, wl1, bl1, wl2, bl2):
    """Pack all parameters into one (48, 16) f32 slab with 8-row-aligned sections."""
    p = np.zeros((48, HID), dtype=np.float32)
    p[0:IN_F, :] = np.asarray(w1)                     # conv1 weight [3, 16]; rows 3:8 = 0
    p[8, :] = np.asarray(b1).reshape(-1)              # conv1 bias
    p[9, :] = np.asarray(b2).reshape(-1)              # conv2 bias
    p[10, 0:NUM_CLASSES] = np.asarray(bl1).reshape(-1)        # lin  bias -> cols 0:7
    p[10, HALF:HALF + NUM_CLASSES] = np.asarray(bl2).reshape(-1)  # lin2 bias -> cols 8:15
    p[16:32, :] = np.asarray(w2)                      # conv2 weight [16, 16]
    p[32:48, 0:NUM_CLASSES] = np.asarray(wl1)                 # lin  weight -> cols 0:7
    p[32:48, HALF:HALF + NUM_CLASSES] = np.asarray(wl2)       # lin2 weight -> cols 8:15
    return jnp.asarray(p)


def gnn_forward(a_hat_b, x_b, packed_params, gb=32):
    """a_hat_b: [B,8,8], x_b: [B,8,3], packed_params: [48,16] -> [B,2,1,7]."""
    B = a_hat_b.shape[0]
    nb = pl.cdiv(B, gb)
    Bp = nb * gb
    M = gb * NUM_NODES

    # Zero-pad the batch tail; padded graphs are isolated by the block-diagonal
    # adjacency, so they never pollute real graphs and are sliced off below.
    a_p = jnp.zeros((Bp, NUM_NODES, NUM_NODES), jnp.float32).at[:B].set(a_hat_b)
    # Pad features 3 -> 8 columns so all operands stay tile-aligned.
    x_p = jnp.zeros((Bp, NUM_NODES, IN_F_PAD), jnp.float32).at[:B, :, :IN_F].set(x_b)

    # Block-diagonal adjacency per grid step: (nb, M, M).
    eye = jnp.eye(gb, dtype=jnp.float32)
    a_bd = jnp.einsum(
        "ngij,gh->ngihj",
        a_p.reshape(nb, gb, NUM_NODES, NUM_NODES), eye,
    ).reshape(nb, M, M)
    x_stk = x_p.reshape(nb, M, IN_F_PAD)

    flops = 2 * nb * (M * M * IN_F_PAD       # A_bd @ X
                      + M * IN_F_PAD * HID   # (AX) @ W1
                      + M * M * HID          # A_bd @ H
                      + M * HID * HID        # (AH) @ W2
                      + gb * M * HID         # pooling matmul
                      + gb * HID * HID)      # fused heads
    transcendentals = nb * gb * (HID + 2)
    bytes_accessed = 4 * (nb * M * M + nb * M * IN_F_PAD + 48 * HID + nb * gb * HID)

    out = pl.pallas_call(
        gnn_kernel,
        out_shape=jax.ShapeDtypeStruct((nb, gb, HID), jnp.float32),
        grid=(nb,),
        in_specs=[
            pl.BlockSpec((1, M, M), lambda b: (b, 0, 0)),
            pl.BlockSpec((1, M, IN_F_PAD), lambda b: (b, 0, 0)),
            pl.BlockSpec((48, HID), lambda b: (0, 0)),   # params resident across grid
        ],
        out_specs=pl.BlockSpec((1, gb, HID), lambda b: (b, 0, 0)),
        compiler_params=pltpu.CompilerParams(
            dimension_semantics=("parallel",)),
        cost_estimate=pl.CostEstimate(
            flops=int(flops),
            transcendentals=int(transcendentals),
            bytes_accessed=int(bytes_accessed)),
    )(a_bd, x_stk, packed_params)

    r = out.reshape(Bp, HID)[:B]                          # [B, 16]
    out1 = r[:, 0:NUM_CLASSES]                            # head 1
    out2 = r[:, HALF:HALF + NUM_CLASSES]                  # head 2
    # Module layout per graph: stack([log_softmax(lin), log_softmax(lin2)]) -> (2, 1, 7)
    return jnp.stack([out1, out2], axis=1)[:, :, None, :]  # [B, 2, 1, 7]


def reference_forward(a_hat_b, x_b, w1, b1, w2, b2, wl1, bl1, wl2, bl2):
    def one(a, x):
        h = jnp.maximum(a @ (x @ w1) + b1, 0.0)
        h = jnp.maximum(a @ (h @ w2) + b2, 0.0)
        pooled = jnp.sum(h, axis=0, keepdims=True)
        o1 = jax.nn.log_softmax(pooled @ wl1 + bl1, axis=-1)
        o2 = jax.nn.log_softmax(pooled @ wl2 + bl2, axis=-1)
        return jnp.stack([o1, o2], axis=0)  # (2, 1, 7)
    return jax.vmap(one)(a_hat_b, x_b)


if __name__ == "__main__":
    key = jax.random.PRNGKey(0)
    keys = jax.random.split(key, 8)

    B = 48    # graphs in the batch (non-multiple of GB to exercise tail padding)
    GB = 32   # graphs per grid step -> M = 256 rows per stacked matmul, 2 grid steps

    # Graph 0: the module's 8-node path graph (same edge_index as the spec).
    edge_index_path = np.array(
        [[0, 1, 1, 2, 2, 3, 3, 4, 4, 5, 5, 6, 6, 7],
         [1, 0, 2, 1, 3, 2, 4, 3, 5, 4, 6, 5, 7, 6]], dtype=np.int32)
    adj0 = np.zeros((NUM_NODES, NUM_NODES), dtype=np.float32)
    adj0[edge_index_path[1], edge_index_path[0]] = 1.0

    # Remaining graphs: deterministic random undirected graphs.
    rng = np.random.RandomState(0)
    adjs = [adj0]
    for _ in range(B - 1):
        u = np.triu((rng.rand(NUM_NODES, NUM_NODES) < 0.35).astype(np.float32), 1)
        adjs.append(u + u.T)
    a_hat_b = jnp.asarray(
        np.stack([build_normalized_adj(a) for a in adjs], axis=0))   # [B, 8, 8]

    x_b = jax.random.normal(keys[0], (B, NUM_NODES, IN_F), dtype=jnp.float32)

    # Deterministic parameter init (shapes from the module __init__).
    # GCNConv weights as [in, out]; Linear weights pre-transposed to [in, out].
    w1 = 0.1 * jax.random.normal(keys[1], (IN_F, HID), dtype=jnp.float32)
    b1 = jnp.zeros((1, HID), dtype=jnp.float32)
    w2 = 0.1 * jax.random.normal(keys[2], (HID, HID), dtype=jnp.float32)
    b2 = jnp.zeros((1, HID), dtype=jnp.float32)
    wl1 = 0.1 * jax.random.normal(keys[3], (HID, NUM_CLASSES), dtype=jnp.float32)
    bl1 = 0.01 * jax.random.normal(keys[4], (1, NUM_CLASSES), dtype=jnp.float32)
    wl2 = 0.1 * jax.random.normal(keys[5], (HID, NUM_CLASSES), dtype=jnp.float32)
    bl2 = 0.01 * jax.random.normal(keys[6], (1, NUM_CLASSES), dtype=jnp.float32)

    packed = pack_params(w1, b1, w2, b2, wl1, bl1, wl2, bl2)

    out = gnn_forward(a_hat_b, x_b, packed, gb=GB)
    out = jax.block_until_ready(out)
    assert out.shape == (B, 2, 1, NUM_CLASSES)
    assert bool(jnp.all(jnp.isfinite(out)))

    ref = reference_forward(a_hat_b, x_b, w1, b1, w2, b2, wl1, bl1, wl2, bl2)
    np.testing.assert_allclose(np.asarray(out), np.asarray(ref), rtol=1e-5, atol=1e-5)

    print("KERNEL_OK")
</pallas_src>

<mosaic_0001>
module attributes {stable_mosaic.version = 11 : i64} {
  func.func @gnn_kernel(%arg0: i32, %arg1: memref<1x256x256xf32, #tpu.memory_space<vmem>>, %arg2: memref<1x256x8xf32, #tpu.memory_space<vmem>>, %arg3: memref<48x16xf32, #tpu.memory_space<vmem>>, %arg4: memref<1x32x16xf32, #tpu.memory_space<vmem>>) attributes {dimension_semantics = [#tpu.dimension_semantics<parallel>], iteration_bounds = array<i64: 2>, scalar_prefetch = 0 : i64, scratch_operands = 0 : i64, tpu.core_type = #tpu.core_type<tc>, window_params = [{transform_indices = @transform_0, window_bounds = array<i64: 1, 256, 256>}, {transform_indices = @transform_1, window_bounds = array<i64: 1, 256, 8>}, {pipeline_mode = #tpu.pipeline_mode<synchronous>, transform_indices = @transform_2, window_bounds = array<i64: 48, 16>}, {transform_indices = @transform_3, window_bounds = array<i64: 1, 32, 16>}]} {
    %c0 = arith.constant 0 : index
    %c0_0 = arith.constant 0 : index
    %c0_1 = arith.constant 0 : index
    %0 = vector.load %arg1[%c0, %c0_0, %c0_1] : memref<1x256x256xf32, #tpu.memory_space<vmem>>, vector<1x256x256xf32>
    %1 = vector.shape_cast %0 : vector<1x256x256xf32> to vector<256x256xf32>
    %c0_2 = arith.constant 0 : index
    %c0_3 = arith.constant 0 : index
    %c0_4 = arith.constant 0 : index
    %2 = vector.load %arg2[%c0_2, %c0_3, %c0_4] : memref<1x256x8xf32, #tpu.memory_space<vmem>>, vector<1x256x8xf32>
    %3 = vector.shape_cast %2 : vector<1x256x8xf32> to vector<256x8xf32>
    %c0_5 = arith.constant 0 : index
    %c0_6 = arith.constant 0 : index
    %4 = vector.load %arg3[%c0_5, %c0_6] : memref<48x16xf32, #tpu.memory_space<vmem>>, vector<8x16xf32>
    %c8 = arith.constant 8 : index
    %c0_7 = arith.constant 0 : index
    %5 = vector.load %arg3[%c8, %c0_7] : memref<48x16xf32, #tpu.memory_space<vmem>>, vector<1x16xf32>
    %c9 = arith.constant 9 : index
    %c0_8 = arith.constant 0 : index
    %6 = vector.load %arg3[%c9, %c0_8] : memref<48x16xf32, #tpu.memory_space<vmem>>, vector<1x16xf32>
    %c10 = arith.constant 10 : index
    %c0_9 = arith.constant 0 : index
    %7 = vector.load %arg3[%c10, %c0_9] : memref<48x16xf32, #tpu.memory_space<vmem>>, vector<1x16xf32>
    %c16 = arith.constant 16 : index
    %c0_10 = arith.constant 0 : index
    %8 = vector.load %arg3[%c16, %c0_10] : memref<48x16xf32, #tpu.memory_space<vmem>>, vector<16x16xf32>
    %c32 = arith.constant 32 : index
    %c0_11 = arith.constant 0 : index
    %9 = vector.load %arg3[%c32, %c0_11] : memref<48x16xf32, #tpu.memory_space<vmem>>, vector<16x16xf32>
    %cst = arith.constant dense<0.000000e+00> : vector<256x8xf32>
    %10 = tpu.matmul %1, %3, %cst {dimension_numbers = #tpu.dot_dimension_numbers<[1], [0], [0], [1], [0, 0, 1, 1], [], []>} : vector<256x256xf32>, vector<256x8xf32>, vector<256x8xf32> -> vector<256x8xf32>
    %cst_12 = arith.constant dense<0.000000e+00> : vector<256x16xf32>
    %11 = tpu.matmul %10, %4, %cst_12 {dimension_numbers = #tpu.dot_dimension_numbers<[1], [0], [0], [1], [0, 0, 1, 1], [], []>} : vector<256x8xf32>, vector<8x16xf32>, vector<256x16xf32> -> vector<256x16xf32>
    %12 = vector.broadcast %5 : vector<1x16xf32> to vector<256x16xf32>
    %13 = arith.addf %11, %12 : vector<256x16xf32>
    %cst_13 = arith.constant 0.000000e+00 : f32
    %14 = vector.broadcast %cst_13 : f32 to vector<256x16xf32>
    %15 = arith.maximumf %13, %14 : vector<256x16xf32>
    %cst_14 = arith.constant dense<0.000000e+00> : vector<256x16xf32>
    %16 = tpu.matmul %1, %15, %cst_14 {dimension_numbers = #tpu.dot_dimension_numbers<[1], [0], [0], [1], [0, 0, 1, 1], [], []>} : vector<256x256xf32>, vector<256x16xf32>, vector<256x16xf32> -> vector<256x16xf32>
    %cst_15 = arith.constant dense<0.000000e+00> : vector<256x16xf32>
    %17 = tpu.matmul %16, %8, %cst_15 {dimension_numbers = #tpu.dot_dimension_numbers<[1], [0], [0], [1], [0, 0, 1, 1], [], []>} : vector<256x16xf32>, vector<16x16xf32>, vector<256x16xf32> -> vector<256x16xf32>
    %18 = vector.broadcast %6 : vector<1x16xf32> to vector<256x16xf32>
    %19 = arith.addf %17, %18 : vector<256x16xf32>
    %cst_16 = arith.constant 0.000000e+00 : f32
    %20 = vector.broadcast %cst_16 : f32 to vector<256x16xf32>
    %21 = arith.maximumf %19, %20 : vector<256x16xf32>
    %22 = tpu.iota {dimensions = array<i32: 0>} : vector<32x256xi32>
    %23 = tpu.iota {dimensions = array<i32: 1>} : vector<32x256xi32>
    %c8_i32 = arith.constant 8 : i32
    %24 = vector.broadcast %c8_i32 : i32 to vector<32x256xi32>
    %25 = arith.muli %22, %24 : vector<32x256xi32>
    %26 = arith.subi %23, %25 : vector<32x256xi32>
    %c0_i32 = arith.constant 0 : i32
    %27 = vector.broadcast %c0_i32 : i32 to vector<32x256xi32>
    %28 = arith.cmpi sge, %26, %27 : vector<32x256xi32>
    %c8_i32_17 = arith.constant 8 : i32
    %29 = vector.broadcast %c8_i32_17 : i32 to vector<32x256xi32>
    %30 = arith.cmpi slt, %26, %29 : vector<32x256xi32>
    %31 = arith.andi %28, %30 : vector<32x256xi1>
    %32 = arith.extui %31 : vector<32x256xi1> to vector<32x256xi32>
    %33 = arith.sitofp %32 : vector<32x256xi32> to vector<32x256xf32>
    %cst_18 = arith.constant dense<0.000000e+00> : vector<32x16xf32>
    %34 = tpu.matmul %33, %21, %cst_18 {dimension_numbers = #tpu.dot_dimension_numbers<[1], [0], [0], [1], [0, 0, 1, 1], [], []>} : vector<32x256xf32>, vector<256x16xf32>, vector<32x16xf32> -> vector<32x16xf32>
    %cst_19 = arith.constant dense<0.000000e+00> : vector<32x16xf32>
    %35 = tpu.matmul %34, %9, %cst_19 {dimension_numbers = #tpu.dot_dimension_numbers<[1], [0], [0], [1], [0, 0, 1, 1], [], []>} : vector<32x16xf32>, vector<16x16xf32>, vector<32x16xf32> -> vector<32x16xf32>
    %36 = vector.broadcast %7 : vector<1x16xf32> to vector<32x16xf32>
    %37 = arith.addf %35, %36 : vector<32x16xf32>
    %38 = tpu.iota {dimensions = array<i32: 1>} : vector<1x16xi32>
    %c8_i32_20 = arith.constant 8 : i32
    %c0_i32_21 = arith.constant 0 : i32
    %39 = arith.cmpi eq, %c8_i32_20, %c0_i32_21 : i32
    %c1_i32 = arith.constant 1 : i32
    %40 = arith.select %39, %c1_i32, %c8_i32_20 : i32
    %41 = vector.broadcast %40 : i32 to vector<1x16xi32>
    %42 = arith.remsi %38, %41 : vector<1x16xi32>
    %c0_i32_22 = arith.constant 0 : i32
    %43 = vector.broadcast %c0_i32_22 : i32 to vector<1x16xi32>
    %44 = arith.cmpi ne, %42, %43 : vector<1x16xi32>
    %c0_i32_23 = arith.constant 0 : i32
    %45 = vector.broadcast %c0_i32_23 : i32 to vector<1x16xi32>
    %46 = arith.cmpi slt, %42, %45 : vector<1x16xi32>
    %c0_i32_24 = arith.constant 0 : i32
    %47 = arith.cmpi slt, %40, %c0_i32_24 : i32
    %48 = vector.broadcast %47 : i1 to vector<1x16xi1>
    %49 = vector.broadcast %48 : vector<1x16xi1> to vector<1x16xi1>
    %50 = arith.xori %46, %49 : vector<1x16xi1>
    %51 = arith.andi %50, %44 : vector<1x16xi1>
    %52 = vector.broadcast %40 : i32 to vector<1x16xi32>
    %53 = arith.addi %42, %52 : vector<1x16xi32>
    %54 = arith.select %51, %53, %42 : vector<1x16xi1>, vector<1x16xi32>
    %c7_i32 = arith.constant 7 : i32
    %55 = vector.broadcast %c7_i32 : i32 to vector<1x16xi32>
    %56 = arith.cmpi slt, %54, %55 : vector<1x16xi32>
    %c8_i32_25 = arith.constant 8 : i32
    %57 = vector.broadcast %c8_i32_25 : i32 to vector<1x16xi32>
    %58 = arith.cmpi sge, %38, %57 : vector<1x16xi32>
    %cst_26 = arith.constant 0xFF800000 : f32
    %59 = vector.shape_cast %56 : vector<1x16xi1> to vector<1x16xi1>
    %60 = vector.broadcast %59 : vector<1x16xi1> to vector<32x16xi1>
    %61 = vector.broadcast %cst_26 : f32 to vector<32x16xf32>
    %62 = arith.select %60, %37, %61 : vector<32x16xi1>, vector<32x16xf32>
    %cst_27 = arith.constant 0xFF800000 : f32
    %63 = vector.shape_cast %58 : vector<1x16xi1> to vector<1x16xi1>
    %64 = vector.broadcast %63 : vector<1x16xi1> to vector<32x16xi1>
    %65 = vector.broadcast %cst_27 : f32 to vector<32x16xf32>
    %66 = arith.select %64, %65, %62 : vector<32x16xi1>, vector<32x16xf32>
    %cst_28 = arith.constant dense<0xFF800000> : vector<32xf32>
    %67 = vector.multi_reduction <maximumf>, %66, %cst_28 [1] : vector<32x16xf32> to vector<32xf32>
    %68 = vector.shape_cast %67 : vector<32xf32> to vector<32x1xf32>
    %cst_29 = arith.constant 0xFF800000 : f32
    %69 = vector.shape_cast %58 : vector<1x16xi1> to vector<1x16xi1>
    %70 = vector.broadcast %69 : vector<1x16xi1> to vector<32x16xi1>
    %71 = vector.broadcast %cst_29 : f32 to vector<32x16xf32>
    %72 = arith.select %70, %62, %71 : vector<32x16xi1>, vector<32x16xf32>
    %cst_30 = arith.constant dense<0xFF800000> : vector<32xf32>
    %73 = vector.multi_reduction <maximumf>, %72, %cst_30 [1] : vector<32x16xf32> to vector<32xf32>
    %74 = vector.shape_cast %73 : vector<32xf32> to vector<32x1xf32>
    %75 = vector.shape_cast %58 : vector<1x16xi1> to vector<1x16xi1>
    %76 = vector.broadcast %75 : vector<1x16xi1> to vector<32x16xi1>
    %77 = vector.shape_cast %74 : vector<32x1xf32> to vector<32x1xf32>
    %78 = vector.broadcast %77 : vector<32x1xf32> to vector<32x16xf32>
    %79 = vector.shape_cast %68 : vector<32x1xf32> to vector<32x1xf32>
    %80 = vector.broadcast %79 : vector<32x1xf32> to vector<32x16xf32>
    %81 = arith.select %76, %78, %80 : vector<32x16xi1>, vector<32x16xf32>
    %82 = arith.subf %37, %81 : vector<32x16xf32>
    %83 = math.exp %82 : vector<32x16xf32>
    %cst_31 = arith.constant 0.000000e+00 : f32
    %84 = vector.shape_cast %56 : vector<1x16xi1> to vector<1x16xi1>
    %85 = vector.broadcast %84 : vector<1x16xi1> to vector<32x16xi1>
    %86 = vector.broadcast %cst_31 : f32 to vector<32x16xf32>
    %87 = arith.select %85, %83, %86 : vector<32x16xi1>, vector<32x16xf32>
    %cst_32 = arith.constant 0.000000e+00 : f32
    %88 = vector.shape_cast %58 : vector<1x16xi1> to vector<1x16xi1>
    %89 = vector.broadcast %88 : vector<1x16xi1> to vector<32x16xi1>
    %90 = vector.broadcast %cst_32 : f32 to vector<32x16xf32>
    %91 = arith.select %89, %90, %87 : vector<32x16xi1>, vector<32x16xf32>
    %cst_33 = arith.constant dense<0.000000e+00> : vector<32xf32>
    %92 = vector.multi_reduction <add>, %91, %cst_33 [1] : vector<32x16xf32> to vector<32xf32>
    %93 = vector.shape_cast %92 : vector<32xf32> to vector<32x1xf32>
    %cst_34 = arith.constant 0.000000e+00 : f32
    %94 = vector.shape_cast %58 : vector<1x16xi1> to vector<1x16xi1>
    %95 = vector.broadcast %94 : vector<1x16xi1> to vector<32x16xi1>
    %96 = vector.broadcast %cst_34 : f32 to vector<32x16xf32>
    %97 = arith.select %95, %87, %96 : vector<32x16xi1>, vector<32x16xf32>
    %cst_35 = arith.constant dense<0.000000e+00> : vector<32xf32>
    %98 = vector.multi_reduction <add>, %97, %cst_35 [1] : vector<32x16xf32> to vector<32xf32>
    %99 = vector.shape_cast %98 : vector<32xf32> to vector<32x1xf32>
    %100 = math.log %99 : vector<32x1xf32>
    %101 = math.log %93 : vector<32x1xf32>
    %102 = vector.shape_cast %58 : vector<1x16xi1> to vector<1x16xi1>
    %103 = vector.broadcast %102 : vector<1x16xi1> to vector<32x16xi1>
    %104 = vector.shape_cast %100 : vector<32x1xf32> to vector<32x1xf32>
    %105 = vector.broadcast %104 : vector<32x1xf32> to vector<32x16xf32>
    %106 = vector.shape_cast %101 : vector<32x1xf32> to vector<32x1xf32>
    %107 = vector.broadcast %106 : vector<32x1xf32> to vector<32x16xf32>
    %108 = arith.select %103, %105, %107 : vector<32x16xi1>, vector<32x16xf32>
    %109 = arith.subf %37, %81 : vector<32x16xf32>
    %110 = arith.subf %109, %108 : vector<32x16xf32>
    %cst_36 = arith.constant 0.000000e+00 : f32
    %111 = vector.shape_cast %56 : vector<1x16xi1> to vector<1x16xi1>
    %112 = vector.broadcast %111 : vector<1x16xi1> to vector<32x16xi1>
    %113 = vector.broadcast %cst_36 : f32 to vector<32x16xf32>
    %114 = arith.select %112, %110, %113 : vector<32x16xi1>, vector<32x16xf32>
    %c0_37 = arith.constant 0 : index
    %c0_38 = arith.constant 0 : index
    %c0_39 = arith.constant 0 : index
    %115 = vector.load %arg4[%c0_37, %c0_38, %c0_39] : memref<1x32x16xf32, #tpu.memory_space<vmem>>, vector<1x32x16xf32>
    %116 = vector.shape_cast %115 : vector<1x32x16xf32> to vector<32x16xf32>
    %117 = vector.shape_cast %114 : vector<32x16xf32> to vector<1x32x16xf32>
    tpu.vector_store %arg4[%c0_37, %c0_38, %c0_39], %117 {strides = array<i32>} : memref<1x32x16xf32, #tpu.memory_space<vmem>>, vector<1x32x16xf32>,
    return
  }
  func.func @transform_0(%arg0: i32) -> (i32, i32, i32) {
    %c0_i32 = arith.constant 0 : i32
    %c0_i32_0 = arith.constant 0 : i32
    %c0_i32_1 = arith.constant 0 : i32
    return %arg0, %c0_i32, %c0_i32_0 : i32, i32, i32
  }
  func.func @transform_1(%arg0: i32) -> (i32, i32, i32) {
    %c0_i32 = arith.constant 0 : i32
    %c0_i32_0 = arith.constant 0 : i32
    %c0_i32_1 = arith.constant 0 : i32
    return %arg0, %c0_i32, %c0_i32_0 : i32, i32, i32
  }
  func.func @transform_2(%arg0: i32) -> (i32, i32) {
    %c0_i32 = arith.constant 0 : i32
    %c0_i32_0 = arith.constant 0 : i32
    %c0_i32_1 = arith.constant 0 : i32
    return %c0_i32, %c0_i32_0 : i32, i32
  }
  func.func @transform_3(%arg0: i32) -> (i32, i32, i32) {
    %c0_i32 = arith.constant 0 : i32
    %c0_i32_0 = arith.constant 0 : i32
    %c0_i32_1 = arith.constant 0 : i32
    return %arg0, %c0_i32, %c0_i32_0 : i32, i32, i32
  }
}

</mosaic_0001>

<llo_original>
// kernel: tpu_custom_call.1
$region0: #{tpu_custom_call.1}
  #allocation0 [shape = 'u32[]', space=smem, size = 0x4, offset = 0x4, fixed_abs, tag = 'smem constant byte address 0x4 - core index']
  #allocation1 [shape = 'u32[72,128]{1,0:T(1,128)}', space=vmem, size = 0x9000, scoped, tag = 'internal scratch']
  %s0 = inlined_call_operand.hbm [shape: f32[2,256,256], index: 0, kind: input, shape index: {}]
  %s1 = inlined_call_operand.vmem [shape: f32[2,256,8], index: 1, kind: input, shape index: {}]
  %s2 = inlined_call_operand.vmem [shape: f32[48,16], index: 2, kind: input, shape index: {}]
  %s3 = inlined_call_operand.vmem [shape: f32[2,32,16], index: 3, kind: output, shape index: {}]
  %s4 = sld [smem:[#allocation0]]
  $region49: #{tpu_custom_call.1} parent=0
    _
  %s6 = ssub.s32 1, %s4
  %s7 = scalar_select 0, %s6, %s4
  $region1: #{tpu_custom_call.1} parent=0
    #allocation2 [shape = 'u8[524288]{0}', space=vmem, size = 0x80000, scoped, tag = 'input window, operand 0']
    #allocation3 [shape = 's32[2]{0}', space=sflag, size = 0x8, scoped, tag = 'scoped memory for tpu_custom_call.1']
    %8 = vsyncpa [#allocation3], 0
    %s9 = scalar_lea.sflag [#allocation3], 1
    %10 = vsyncpa %s9, 0
    loop: start=0, step=1, limit=4
    $region2: #{tpu_custom_call.1} parent=1 // loop_pre_header
      _
    $region3: #{tpu_custom_call.1} parent=1 // loop_header
      %s12 = sphi 0, %s16
      %p13 = scmp.ge.s32.totalorder %s12, 4
      %s22 = sphi 0, %s24
      %s25 = sphi 0, %s22
      %s26 = sphi 0, %s25
      %s42 = sphi 0, %s26
      %s48 = sphi 0, %s50
      %s51 = sphi 0, %s48
      %s52 = sphi 0, %s51
      %s68 = sphi 0, %s52
      %s72 = sphi 0, %s72
      %s74 = sphi 0, %s72
      %s75 = sphi 0, %s74
      %s89 = sphi 0, %s75
      %s95 = sphi 0, %s97
      %s98 = sphi 0, %s95
      %s99 = sphi 0, %s98
      %s115 = sphi 0, %s99
    $region4: #{tpu_custom_call.1} parent=1 // loop_header_branch
      %15 = sbr.rel (%p13) target = $region8
    $region5: #{tpu_custom_call.1} parent=1 // loop_body
      %s17 = ssub.s32 %s12, 1
      %s18 = ssub.s32 %s12, 2
      %s19 = sadd.s32 %s12, 1
      %s20 = ssub.s32 %s12, %s19
      %p21 = scmp.eq.s32.totalorder %s20, 0
      %s23 = sadd.s32 %s22, 1
      %s24 = scalar_select %p21, %s22, %s23
      %p27 = pneg %p21
      %p28 = scmp.eq.s32.totalorder %s12, 1
      %p29 = por %p27, %p28
      %p30 = scmp.ne.s32.totalorder %s22, %s25
      %p31 = scmp.eq.s32.totalorder %s12, 0
      %p32 = por %p30, %p31
      %p33 = scmp.ne.s32.totalorder %s22, %s25
      %p34 = scmp.eq.s32.totalorder %s17, 1
      %p35 = por %p33, %p34
      %p36 = scmp.ne.s32.totalorder %s25, %s26
      %p37 = scmp.eq.s32.totalorder %s17, 0
      %p38 = por %p36, %p37
      %p39 = scmp.ne.s32.totalorder %s25, %s26
      %p40 = scmp.eq.s32.totalorder %s18, 1
      %p41 = por %p39, %p40
      %p43 = scmp.ne.s32.totalorder %s26, %s42
      %p44 = scmp.eq.s32.totalorder %s18, 0
      %p45 = por %p43, %p44
      %s46 = ssub.s32 %s12, %s19
      %p47 = scmp.eq.s32.totalorder %s46, 0
      %s49 = sadd.s32 %s48, 1
      %s50 = scalar_select %p47, %s48, %s49
      %p53 = pneg %p47
      %p54 = scmp.eq.s32.totalorder %s12, 1
      %p55 = por %p53, %p54
      %p56 = scmp.ne.s32.totalorder %s48, %s51
      %p57 = scmp.eq.s32.totalorder %s12, 0
      %p58 = por %p56, %p57
      %p59 = scmp.ne.s32.totalorder %s48, %s51
      %p60 = scmp.eq.s32.totalorder %s17, 1
      %p61 = por %p59, %p60
      %p62 = scmp.ne.s32.totalorder %s51, %s52
      %p63 = scmp.eq.s32.totalorder %s17, 0
      %p64 = por %p62, %p63
      %p65 = scmp.ne.s32.totalorder %s51, %s52
      %p66 = scmp.eq.s32.totalorder %s18, 1
      %p67 = por %p65, %p66
      %p69 = scmp.ne.s32.totalorder %s52, %s68
      %p70 = scmp.eq.s32.totalorder %s18, 0
      %p71 = por %p69, %p70
      %s73 = sadd.s32 %s72, 1
      %p76 = scmp.eq.s32.totalorder %s12, 1
      %p77 = scmp.ne.s32.totalorder %s72, %s74
      %p78 = scmp.eq.s32.totalorder %s12, 0
      %p79 = por %p77, %p78
      %p80 = scmp.ne.s32.totalorder %s72, %s74
      %p81 = scmp.eq.s32.totalorder %s17, 1
      %p82 = por %p80, %p81
      %p83 = scmp.ne.s32.totalorder %s74, %s75
      %p84 = scmp.eq.s32.totalorder %s17, 0
      %p85 = por %p83, %p84
      %p86 = scmp.ne.s32.totalorder %s74, %s75
      %p87 = scmp.eq.s32.totalorder %s18, 1
      %p88 = por %p86, %p87
      %p90 = scmp.ne.s32.totalorder %s75, %s89
      %p91 = scmp.eq.s32.totalorder %s18, 0
      %p92 = por %p90, %p91
      %s93 = ssub.s32 %s12, %s19
      %p94 = scmp.eq.s32.totalorder %s93, 0
      %s96 = sadd.s32 %s95, 1
      %s97 = scalar_select %p94, %s95, %s96
      %p100 = pneg %p94
      %p101 = scmp.eq.s32.totalorder %s12, 1
      %p102 = por %p100, %p101
      %p103 = scmp.ne.s32.totalorder %s95, %s98
      %p104 = scmp.eq.s32.totalorder %s12, 0
      %p105 = por %p103, %p104
      %p106 = scmp.ne.s32.totalorder %s95, %s98
      %p107 = scmp.eq.s32.totalorder %s17, 1
      %p108 = por %p106, %p107
      %p109 = scmp.ne.s32.totalorder %s98, %s99
      %p110 = scmp.eq.s32.totalorder %s17, 0
      %p111 = por %p109, %p110
      %p112 = scmp.ne.s32.totalorder %s98, %s99
      %p113 = scmp.eq.s32.totalorder %s18, 1
      %p114 = por %p112, %p113
      %p116 = scmp.ne.s32.totalorder %s99, %s115
      %p117 = scmp.eq.s32.totalorder %s18, 0
      %p118 = por %p116, %p117
      %p119 = scmp.le.s32.totalorder 1, %s12
      %p120 = scmp.lt.s32.totalorder %s12, 3
      %p121 = pnand %p119, %p120
      %p122 = pneg %p121
      // Predicated region
      $region9: #{tpu_custom_call.1} parent=5 // pred_check
        _
      $region10: #{tpu_custom_call.1} parent=5 // pred_check_branch
        %124 = sbr.rel (%p121) target = $region12
      $region11: #{tpu_custom_call.1} parent=5 // pred_region
        %s125 = ssub.s32 %s12, 1
        // Predicated region
        $region13: #{tpu_custom_call.1} parent=11 // pred_check
          %p126 = pneg %p85
        $region14: #{tpu_custom_call.1} parent=11 // pred_check_branch
          %128 = sbr.rel (%p126) target = $region16
        $region15: #{tpu_custom_call.1} parent=11 // pred_region
          _
        $region16: #{tpu_custom_call.1} parent=11 // pred_fallthru
          _
      $region12: #{tpu_custom_call.1} parent=5 // pred_fallthru
        _
      %p129 = scmp.lt.s32.totalorder %s12, 2
      // Predicated region
      $region17: #{tpu_custom_call.1} parent=5 // pred_check
        %p130 = pneg %p129
      $region18: #{tpu_custom_call.1} parent=5 // pred_check_branch
        %132 = sbr.rel (%p130) target = $region20
      $region19: #{tpu_custom_call.1} parent=5 // pred_region
        // Predicated region
        $region21: #{tpu_custom_call.1} parent=19 // pred_check
          %p133 = pneg %p32
        $region22: #{tpu_custom_call.1} parent=19 // pred_check_branch
          %135 = sbr.rel (%p133) target = $region24
        $region23: #{tpu_custom_call.1} parent=19 // pred_region
          %s136 = sand.u32 %s22, 1
          %s137 = scalar_lea.sflag [#allocation3], %s136
          %s138 = sand.u32 %s22, 1
          %s139 = smul.addr %s138, 512
          %s140 = scalar_lea.vmem [#allocation2], %s139
          %142 = vsyncadd %s137, 0
          %s143 = smul.addr %s12, 64
          %s144 = smul.addr %s143, 8
          %s145 = scalar_lea.hbm %s0, %s144
          %s146 = sshll.u32 %s145, 4
          %s147 = int_to_ptr.hbm [resolvable:$true] %s146
          %s148 = sshll.u32 %s140, 4
          %s149 = int_to_ptr.vmem [resolvable:$true] %s148
          %154 = dma.hbm_to_vmem [thread:$0]  %s147, 8192, %s149, %s137, 256, 256, 16
        $region24: #{tpu_custom_call.1} parent=19 // pred_fallthru
          _
        // Predicated region
        $region25: #{tpu_custom_call.1} parent=19 // pred_check
          %p155 = pneg %p58
        $region26: #{tpu_custom_call.1} parent=19 // pred_check_branch
          %157 = sbr.rel (%p155) target = $region28
        $region27: #{tpu_custom_call.1} parent=19 // pred_region
          %p158 = scmp.lt.s32.totalorder %s12, 1
          %s159 = scalar_select %p158, %s12, 1
          %s160 = smul.addr %s159, 32
          %s161 = smul.addr %s160, 8
          %s162 = scalar_lea.vmem %s1, %s161
        $region28: #{tpu_custom_call.1} parent=19 // pred_fallthru
          _
      $region20: #{tpu_custom_call.1} parent=5 // pred_fallthru
        _
      %p163 = scmp.le.s32.totalorder 1, %s12
      %p164 = scmp.lt.s32.totalorder %s12, 3
      %p165 = pnand %p163, %p164
      %p166 = pneg %p165
      // Predicated region
      $region29: #{tpu_custom_call.1} parent=5 // pred_check
        _
      $region30: #{tpu_custom_call.1} parent=5 // pred_check_branch
        %168 = sbr.rel (%p165) target = $region32
      $region31: #{tpu_custom_call.1} parent=5 // pred_region
        %s169 = ssub.s32 %s12, 1
        %s170 = sand.u32 %s25, 1
        %s171 = scalar_lea.sflag [#allocation3], %s170
        %s172 = sand.u32 %s25, 1
        %s173 = smul.addr %s172, 512
        %s174 = scalar_lea.vmem [#allocation2], %s173
        // Predicated region
        $region33: #{tpu_custom_call.1} parent=31 // pred_check
          %p175 = pneg %p38
        $region34: #{tpu_custom_call.1} parent=31 // pred_check_branch
          %177 = sbr.rel (%p175) target = $region36
        $region35: #{tpu_custom_call.1} parent=31 // pred_region
          %179 = dma.done %s171, 8192
        $region36: #{tpu_custom_call.1} parent=31 // pred_fallthru
          _
        %s180 = sand.u32 %s25, 1
        %s181 = scalar_lea.sflag [#allocation3], %s180
        %s182 = sand.u32 %s25, 1
        %s183 = smul.addr %s182, 512
        %s184 = scalar_lea.vmem [#allocation2], %s183
        %p185 = pneg %p38
        %p186 = pneg %p35
        %p187 = scmp.lt.s32.totalorder %s17, 1
        %s188 = scalar_select %p187, %s17, 1
        %s189 = smul.addr %s188, 32
        %s190 = smul.addr %s189, 8
        %s191 = scalar_lea.vmem %s1, %s190
        %p192 = pneg %p64
        %p193 = pneg %p61
        %p194 = pneg %p85
        %p195 = pneg %p82
        %p196 = pneg %p111
        %p197 = pneg %p108
        %p198 = scmp.lt.s32.totalorder %s17, 1
        %s199 = scalar_select %p198, %s17, 1
        %s200 = smul.addr %s199, 4
        %s201 = smul.addr %s200, 8
        %s202 = scalar_lea.vmem %s3, %s201
        %p203 = scmp.lt.s32.totalorder %s17, 1
        %s204 = scalar_select %p203, %s17, 1
        %s205 = smul.addr %s204, 32
        %s206 = smul.addr %s205, 8
        %s207 = scalar_lea.vmem %s1, %s206
        %p208 = scmp.lt.s32.totalorder %s17, 1
        %s209 = scalar_select %p208, %s17, 1
        %s210 = smul.addr %s209, 4
        %s211 = smul.addr %s210, 8
        %s212 = scalar_lea.vmem %s3, %s211
        %v213 = vld [vmem:[%s174] sm:$0xff]
        %v214 = vld [vmem:[%s174 + $0x8] sm:$0xff]
        %v215 = vld [vmem:[%s174 + $0x10] sm:$0xff]
        %v216 = vld [vmem:[%s174 + $0x18] sm:$0xff]
        %v217 = vld [vmem:[%s174 + $0x20] sm:$0xff]
        %v218 = vld [vmem:[%s174 + $0x28] sm:$0xff]
        %v219 = vld [vmem:[%s174 + $0x30] sm:$0xff]
        %v220 = vld [vmem:[%s174 + $0x38] sm:$0xff]
        %v221 = vld [vmem:[%s174 + $0x40] sm:$0xff]
        %v222 = vld [vmem:[%s174 + $0x48] sm:$0xff]
        %v223 = vld [vmem:[%s174 + $0x50] sm:$0xff]
        %v224 = vld [vmem:[%s174 + $0x58] sm:$0xff]
        %v225 = vld [vmem:[%s174 + $0x60] sm:$0xff]
        %v226 = vld [vmem:[%s174 + $0x68] sm:$0xff]
        %v227 = vld [vmem:[%s174 + $0x70] sm:$0xff]
        %v228 = vld [vmem:[%s174 + $0x78] sm:$0xff]
        %v229 = vld [vmem:[%s174 + $0x80] sm:$0xff]
        %v230 = vld [vmem:[%s174 + $0x88] sm:$0xff]
        %v231 = vld [vmem:[%s174 + $0x90] sm:$0xff]
        %v232 = vld [vmem:[%s174 + $0x98] sm:$0xff]
        %v233 = vld [vmem:[%s174 + $0xa0] sm:$0xff]
        %v234 = vld [vmem:[%s174 + $0xa8] sm:$0xff]
        %v235 = vld [vmem:[%s174 + $0xb0] sm:$0xff]
        %v236 = vld [vmem:[%s174 + $0xb8] sm:$0xff]
        %v237 = vld [vmem:[%s174 + $0xc0] sm:$0xff]
        %v238 = vld [vmem:[%s174 + $0xc8] sm:$0xff]
        %v239 = vld [vmem:[%s174 + $0xd0] sm:$0xff]
        %v240 = vld [vmem:[%s174 + $0xd8] sm:$0xff]
        %v241 = vld [vmem:[%s174 + $0xe0] sm:$0xff]
        %v242 = vld [vmem:[%s174 + $0xe8] sm:$0xff]
        %v243 = vld [vmem:[%s174 + $0xf0] sm:$0xff]
        %v244 = vld [vmem:[%s174 + $0xf8] sm:$0xff]
        %v245 = vld [vmem:[%s174 + $0x100] sm:$0xff]
        %v246 = vld [vmem:[%s174 + $0x108] sm:$0xff]
        %v247 = vld [vmem:[%s174 + $0x110] sm:$0xff]
        %v248 = vld [vmem:[%s174 + $0x118] sm:$0xff]
        %v249 = vld [vmem:[%s174 + $0x120] sm:$0xff]
        %v250 = vld [vmem:[%s174 + $0x128] sm:$0xff]
        %v251 = vld [vmem:[%s174 + $0x130] sm:$0xff]
        %v252 = vld [vmem:[%s174 + $0x138] sm:$0xff]
        %v253 = vld [vmem:[%s174 + $0x140] sm:$0xff]
        %v254 = vld [vmem:[%s174 + $0x148] sm:$0xff]
        %v255 = vld [vmem:[%s174 + $0x150] sm:$0xff]
        %v256 = vld [vmem:[%s174 + $0x158] sm:$0xff]
        %v257 = vld [vmem:[%s174 + $0x160] sm:$0xff]
        %v258 = vld [vmem:[%s174 + $0x168] sm:$0xff]
        %v259 = vld [vmem:[%s174 + $0x170] sm:$0xff]
        %v260 = vld [vmem:[%s174 + $0x178] sm:$0xff]
        %v261 = vld [vmem:[%s174 + $0x180] sm:$0xff]
        %v262 = vld [vmem:[%s174 + $0x188] sm:$0xff]
        %v263 = vld [vmem:[%s174 + $0x190] sm:$0xff]
        %v264 = vld [vmem:[%s174 + $0x198] sm:$0xff]
        %v265 = vld [vmem:[%s174 + $0x1a0] sm:$0xff]
        %v266 = vld [vmem:[%s174 + $0x1a8] sm:$0xff]
        %v267 = vld [vmem:[%s174 + $0x1b0] sm:$0xff]
        %v268 = vld [vmem:[%s174 + $0x1b8] sm:$0xff]
        %v269 = vld [vmem:[%s174 + $0x1c0] sm:$0xff]
        %v270 = vld [vmem:[%s174 + $0x1c8] sm:$0xff]
        %v271 = vld [vmem:[%s174 + $0x1d0] sm:$0xff]
        %v272 = vld [vmem:[%s174 + $0x1d8] sm:$0xff]
        %v273 = vld [vmem:[%s174 + $0x1e0] sm:$0xff]
        %v274 = vld [vmem:[%s174 + $0x1e8] sm:$0xff]
        %v275 = vld [vmem:[%s174 + $0x1f0] sm:$0xff]
        %v276 = vld [vmem:[%s174 + $0x1f8] sm:$0xff]
        %v277 = vld [vmem:[%s207] sm:$0xff]
        %v278 = vld [vmem:[%s207 + $0x8] sm:$0xff]
        %v279 = vld [vmem:[%s207 + $0x10] sm:$0xff]
        %v280 = vld [vmem:[%s207 + $0x18] sm:$0xff]
        %v281 = vld [vmem:[%s207 + $0x20] sm:$0xff]
        %v282 = vld [vmem:[%s207 + $0x28] sm:$0xff]
        %v283 = vld [vmem:[%s207 + $0x30] sm:$0xff]
        %v284 = vld [vmem:[%s207 + $0x38] sm:$0xff]
        %v285 = vld [vmem:[%s207 + $0x40] sm:$0xff]
        %v286 = vld [vmem:[%s207 + $0x48] sm:$0xff]
        %v287 = vld [vmem:[%s207 + $0x50] sm:$0xff]
        %v288 = vld [vmem:[%s207 + $0x58] sm:$0xff]
        %v289 = vld [vmem:[%s207 + $0x60] sm:$0xff]
        %v290 = vld [vmem:[%s207 + $0x68] sm:$0xff]
        %v291 = vld [vmem:[%s207 + $0x70] sm:$0xff]
        %v292 = vld [vmem:[%s207 + $0x78] sm:$0xff]
        %v293 = vld [vmem:[%s207 + $0x80] sm:$0xff]
        %v294 = vld [vmem:[%s207 + $0x88] sm:$0xff]
        %v295 = vld [vmem:[%s207 + $0x90] sm:$0xff]
        %v296 = vld [vmem:[%s207 + $0x98] sm:$0xff]
        %v297 = vld [vmem:[%s207 + $0xa0] sm:$0xff]
        %v298 = vld [vmem:[%s207 + $0xa8] sm:$0xff]
        %v299 = vld [vmem:[%s207 + $0xb0] sm:$0xff]
        %v300 = vld [vmem:[%s207 + $0xb8] sm:$0xff]
        %v301 = vld [vmem:[%s207 + $0xc0] sm:$0xff]
        %v302 = vld [vmem:[%s207 + $0xc8] sm:$0xff]
        %v303 = vld [vmem:[%s207 + $0xd0] sm:$0xff]
        %v304 = vld [vmem:[%s207 + $0xd8] sm:$0xff]
        %v305 = vld [vmem:[%s207 + $0xe0] sm:$0xff]
        %v306 = vld [vmem:[%s207 + $0xe8] sm:$0xff]
        %v307 = vld [vmem:[%s207 + $0xf0] sm:$0xff]
        %v308 = vld [vmem:[%s207 + $0xf8] sm:$0xff]
        %v309 = vld [vmem:[%s2] sm:$0xff]
        %v310 = vld [vmem:[%s2 + $0x8] sm:$0x1]
        %v311 = vld [vmem:[%s2 + $0x9] sm:$0x1]
        %v312 = vld [vmem:[%s2 + $0xa] sm:$0x1]
        %v313 = vld [vmem:[%s2 + $0x10] sm:$0xff]
        %v314 = vld [vmem:[%s2 + $0x18] sm:$0xff]
        %v315 = vld [vmem:[%s2 + $0x20] sm:$0xff]
        %v316 = vld [vmem:[%s2 + $0x28] sm:$0xff]
        %317 = vmatpush.msra.mxu0 %v292
        %318 = vmatpush.msra.mxu0 %v291
        %319 = vmatpush.msra.mxu0 %v290
        %320 = vmatpush.msra.mxu0 %v289
        %321 = vmatpush.msra.mxu0 %v288
        %322 = vmatpush.msra.mxu0 %v287
        %323 = vmatpush.msra.mxu0 %v286
        %324 = vmatpush.msra.mxu0 %v285
        %325 = vmatpush.msra.mxu0 %v284
        %326 = vmatpush.msra.mxu0 %v283
        %327 = vmatpush.msra.mxu0 %v282
        %328 = vmatpush.msra.mxu0 %v281
        %329 = vmatpush.msra.mxu0 %v280
        %330 = vmatpush.msra.mxu0 %v279
        %331 = vmatpush.msra.mxu0 %v278
        %332 = vmatpush.msra.mxu0 %v277
        %333 = vmatmul.f32.gmra.mxu0 %v213
        %v334 = vpop.f32.mrf.mxu0
        %v335 = vadd.f32 0.0, %v334
        %336 = vmatmul.f32.gmra.mxu0 %v215
        %v337 = vpop.f32.mrf.mxu0
        %v338 = vadd.f32 0.0, %v337
        %339 = vmatmul.f32.gmra.mxu0 %v217
        %v340 = vpop.f32.mrf.mxu0
        %v341 = vadd.f32 0.0, %v340
        %342 = vmatmul.f32.gmra.mxu0 %v219
        %v343 = vpop.f32.mrf.mxu0
        %v344 = vadd.f32 0.0, %v343
        %345 = vmatmul.f32.gmra.mxu0 %v221
        %v346 = vpop.f32.mrf.mxu0
        %v347 = vadd.f32 0.0, %v346
        %348 = vmatmul.f32.gmra.mxu0 %v223
        %v349 = vpop.f32.mrf.mxu0
        %v350 = vadd.f32 0.0, %v349
        %351 = vmatmul.f32.gmra.mxu0 %v225
        %v352 = vpop.f32.mrf.mxu0
        %v353 = vadd.f32 0.0, %v352
        %354 = vmatmul.f32.gmra.mxu0 %v227
        %v355 = vpop.f32.mrf.mxu0
        %v356 = vadd.f32 0.0, %v355
        %357 = vmatmul.f32.gmra.mxu0 %v229
        %v358 = vpop.f32.mrf.mxu0
        %v359 = vadd.f32 0.0, %v358
        %360 = vmatmul.f32.gmra.mxu0 %v231
        %v361 = vpop.f32.mrf.mxu0
        %v362 = vadd.f32 0.0, %v361
        %363 = vmatmul.f32.gmra.mxu0 %v233
        %v364 = vpop.f32.mrf.mxu0
        %v365 = vadd.f32 0.0, %v364
        %366 = vmatmul.f32.gmra.mxu0 %v235
        %v367 = vpop.f32.mrf.mxu0
        %v368 = vadd.f32 0.0, %v367
        %369 = vmatmul.f32.gmra.mxu0 %v237
        %v370 = vpop.f32.mrf.mxu0
        %v371 = vadd.f32 0.0, %v370
        %372 = vmatmul.f32.gmra.mxu0 %v239
        %v373 = vpop.f32.mrf.mxu0
        %v374 = vadd.f32 0.0, %v373
        %375 = vmatmul.f32.gmra.mxu0 %v241
        %v376 = vpop.f32.mrf.mxu0
        %v377 = vadd.f32 0.0, %v376
        %378 = vmatmul.f32.gmra.mxu0 %v243
        %v379 = vpop.f32.mrf.mxu0
        %v380 = vadd.f32 0.0, %v379
        %381 = vmatmul.f32.gmra.mxu0 %v245
        %v382 = vpop.f32.mrf.mxu0
        %v383 = vadd.f32 0.0, %v382
        %384 = vmatmul.f32.gmra.mxu0 %v247
        %v385 = vpop.f32.mrf.mxu0
        %v386 = vadd.f32 0.0, %v385
        %387 = vmatmul.f32.gmra.mxu0 %v249
        %v388 = vpop.f32.mrf.mxu0
        %v389 = vadd.f32 0.0, %v388
        %390 = vmatmul.f32.gmra.mxu0 %v251
        %v391 = vpop.f32.mrf.mxu0
        %v392 = vadd.f32 0.0, %v391
        %393 = vmatmul.f32.gmra.mxu0 %v253
        %v394 = vpop.f32.mrf.mxu0
        %v395 = vadd.f32 0.0, %v394
        %396 = vmatmul.f32.gmra.mxu0 %v255
        %v397 = vpop.f32.mrf.mxu0
        %v398 = vadd.f32 0.0, %v397
        %399 = vmatmul.f32.gmra.mxu0 %v257
        %v400 = vpop.f32.mrf.mxu0
        %v401 = vadd.f32 0.0, %v400
        %402 = vmatmul.f32.gmra.mxu0 %v259
        %v403 = vpop.f32.mrf.mxu0
        %v404 = vadd.f32 0.0, %v403
        %405 = vmatmul.f32.gmra.mxu0 %v261
        %v406 = vpop.f32.mrf.mxu0
        %v407 = vadd.f32 0.0, %v406
        %408 = vmatmul.f32.gmra.mxu0 %v263
        %v409 = vpop.f32.mrf.mxu0
        %v410 = vadd.f32 0.0, %v409
        %411 = vmatmul.f32.gmra.mxu0 %v265
        %v412 = vpop.f32.mrf.mxu0
        %v413 = vadd.f32 0.0, %v412
        %414 = vmatmul.f32.gmra.mxu0 %v267
        %v415 = vpop.f32.mrf.mxu0
        %v416 = vadd.f32 0.0, %v415
        %417 = vmatmul.f32.gmra.mxu0 %v269
        %v418 = vpop.f32.mrf.mxu0
        %v419 = vadd.f32 0.0, %v418
        %420 = vmatmul.f32.gmra.mxu0 %v271
        %v421 = vpop.f32.mrf.mxu0
        %v422 = vadd.f32 0.0, %v421
        %423 = vmatmul.f32.gmra.mxu0 %v273
        %v424 = vpop.f32.mrf.mxu0
        %v425 = vadd.f32 0.0, %v424
        %426 = vmatmul.f32.gmra.mxu0 %v275
        %v427 = vpop.f32.mrf.mxu0
        %v428 = vadd.f32 0.0, %v427
        %429 = vdwg.mxu0
        %430 = vmatpush.msra.mxu0 %v308
        %431 = vmatpush.msra.mxu0 %v307
        %432 = vmatpush.msra.mxu0 %v306
        %433 = vmatpush.msra.mxu0 %v305
        %434 = vmatpush.msra.mxu0 %v304
        %435 = vmatpush.msra.mxu0 %v303
        %436 = vmatpush.msra.mxu0 %v302
        %437 = vmatpush.msra.mxu0 %v301
        %438 = vmatpush.msra.mxu0 %v300
        %439 = vmatpush.msra.mxu0 %v299
        %440 = vmatpush.msra.mxu0 %v298
        %441 = vmatpush.msra.mxu0 %v297
        %442 = vmatpush.msra.mxu0 %v296
        %443 = vmatpush.msra.mxu0 %v295
        %444 = vmatpush.msra.mxu0 %v294
        %445 = vmatpush.msra.mxu0 %v293
        %446 = vmatmul.f32.gmra.mxu0 %v214
        %v447 = vpop.f32.mrf.mxu0
        %v448 = vadd.f32 %v335, %v447
        %449 = vmatmul.f32.gmra.mxu0 %v216
        %v450 = vpop.f32.mrf.mxu0
        %v451 = vadd.f32 %v338, %v450
        %452 = vmatmul.f32.gmra.mxu0 %v218
        %v453 = vpop.f32.mrf.mxu0
        %v454 = vadd.f32 %v341, %v453
        %455 = vmatmul.f32.gmra.mxu0 %v220
        %v456 = vpop.f32.mrf.mxu0
        %v457 = vadd.f32 %v344, %v456
        %458 = vmatmul.f32.gmra.mxu0 %v222
        %v459 = vpop.f32.mrf.mxu0
        %v460 = vadd.f32 %v347, %v459
        %461 = vmatmul.f32.gmra.mxu0 %v224
        %v462 = vpop.f32.mrf.mxu0
        %v463 = vadd.f32 %v350, %v462
        %464 = vmatmul.f32.gmra.mxu0 %v226
        %v465 = vpop.f32.mrf.mxu0
        %v466 = vadd.f32 %v353, %v465
        %467 = vmatmul.f32.gmra.mxu0 %v228
        %v468 = vpop.f32.mrf.mxu0
        %v469 = vadd.f32 %v356, %v468
        %470 = vmatmul.f32.gmra.mxu0 %v230
        %v471 = vpop.f32.mrf.mxu0
        %v472 = vadd.f32 %v359, %v471
        %473 = vmatmul.f32.gmra.mxu0 %v232
        %v474 = vpop.f32.mrf.mxu0
        %v475 = vadd.f32 %v362, %v474
        %476 = vmatmul.f32.gmra.mxu0 %v234
        %v477 = vpop.f32.mrf.mxu0
        %v478 = vadd.f32 %v365, %v477
        %479 = vmatmul.f32.gmra.mxu0 %v236
        %v480 = vpop.f32.mrf.mxu0
        %v481 = vadd.f32 %v368, %v480
        %482 = vmatmul.f32.gmra.mxu0 %v238
        %v483 = vpop.f32.mrf.mxu0
        %v484 = vadd.f32 %v371, %v483
        %485 = vmatmul.f32.gmra.mxu0 %v240
        %v486 = vpop.f32.mrf.mxu0
        %v487 = vadd.f32 %v374, %v486
        %488 = vmatmul.f32.gmra.mxu0 %v242
        %v489 = vpop.f32.mrf.mxu0
        %v490 = vadd.f32 %v377, %v489
        %491 = vmatmul.f32.gmra.mxu0 %v244
        %v492 = vpop.f32.mrf.mxu0
        %v493 = vadd.f32 %v380, %v492
        %494 = vmatmul.f32.gmra.mxu0 %v246
        %v495 = vpop.f32.mrf.mxu0
        %v496 = vadd.f32 %v383, %v495
        %497 = vmatmul.f32.gmra.mxu0 %v248
        %v498 = vpop.f32.mrf.mxu0
        %v499 = vadd.f32 %v386, %v498
        %500 = vmatmul.f32.gmra.mxu0 %v250
        %v501 = vpop.f32.mrf.mxu0
        %v502 = vadd.f32 %v389, %v501
        %503 = vmatmul.f32.gmra.mxu0 %v252
        %v504 = vpop.f32.mrf.mxu0
        %v505 = vadd.f32 %v392, %v504
        %506 = vmatmul.f32.gmra.mxu0 %v254
        %v507 = vpop.f32.mrf.mxu0
        %v508 = vadd.f32 %v395, %v507
        %509 = vmatmul.f32.gmra.mxu0 %v256
        %v510 = vpop.f32.mrf.mxu0
        %v511 = vadd.f32 %v398, %v510
        %512 = vmatmul.f32.gmra.mxu0 %v258
        %v513 = vpop.f32.mrf.mxu0
        %v514 = vadd.f32 %v401, %v513
        %515 = vmatmul.f32.gmra.mxu0 %v260
        %v516 = vpop.f32.mrf.mxu0
        %v517 = vadd.f32 %v404, %v516
        %518 = vmatmul.f32.gmra.mxu0 %v262
        %v519 = vpop.f32.mrf.mxu0
        %v520 = vadd.f32 %v407, %v519
        %521 = vmatmul.f32.gmra.mxu0 %v264
        %v522 = vpop.f32.mrf.mxu0
        %v523 = vadd.f32 %v410, %v522
        %524 = vmatmul.f32.gmra.mxu0 %v266
        %v525 = vpop.f32.mrf.mxu0
        %v526 = vadd.f32 %v413, %v525
        %527 = vmatmul.f32.gmra.mxu0 %v268
        %v528 = vpop.f32.mrf.mxu0
        %v529 = vadd.f32 %v416, %v528
        %530 = vmatmul.f32.gmra.mxu0 %v270
        %v531 = vpop.f32.mrf.mxu0
        %v532 = vadd.f32 %v419, %v531
        %533 = vmatmul.f32.gmra.mxu0 %v272
        %v534 = vpop.f32.mrf.mxu0
        %v535 = vadd.f32 %v422, %v534
        %536 = vmatmul.f32.gmra.mxu0 %v274
        %v537 = vpop.f32.mrf.mxu0
        %v538 = vadd.f32 %v425, %v537
        %539 = vmatmul.f32.gmra.mxu0 %v276
        %v540 = vpop.f32.mrf.mxu0
        %v541 = vadd.f32 %v428, %v540
        %542 = vdwg.mxu0
        %v543 = vperm.slane %v310, 0
        %vm544 = vcmask 64512
        %v546 = vsel %vm544, %v448, 0
        %v549 = vsel %vm544, %v451, 0
        %v552 = vsel %vm544, %v454, 0
        %v555 = vsel %vm544, %v457, 0
        %v558 = vsel %vm544, %v460, 0
        %v561 = vsel %vm544, %v463, 0
        %v564 = vsel %vm544, %v466, 0
        %v567 = vsel %vm544, %v469, 0
        %v570 = vsel %vm544, %v472, 0
        %v573 = vsel %vm544, %v475, 0
        %v576 = vsel %vm544, %v478, 0
        %v579 = vsel %vm544, %v481, 0
        %v582 = vsel %vm544, %v484, 0
        %v585 = vsel %vm544, %v487, 0
        %v588 = vsel %vm544, %v490, 0
        %v591 = vsel %vm544, %v493, 0
        %v594 = vsel %vm544, %v496, 0
        %v597 = vsel %vm544, %v499, 0
        %v600 = vsel %vm544, %v502, 0
        %v603 = vsel %vm544, %v505, 0
        %v606 = vsel %vm544, %v508, 0
        %v609 = vsel %vm544, %v511, 0
        %v612 = vsel %vm544, %v514, 0
        %v615 = vsel %vm544, %v517, 0
        %v618 = vsel %vm544, %v520, 0
        %v621 = vsel %vm544, %v523, 0
        %v624 = vsel %vm544, %v526, 0
        %v627 = vsel %vm544, %v529, 0
        %v630 = vsel %vm544, %v532, 0
        %v633 = vsel %vm544, %v535, 0
        %v636 = vsel %vm544, %v538, 0
        %v639 = vsel %vm544, %v541, 0
        %641 = vmatpush.msra.mxu0 0.0
        %642 = vmatpush.msra.mxu0 0.0
        %643 = vmatpush.msra.mxu0 0.0
        %644 = vmatpush.msra.mxu0 0.0
        %645 = vmatpush.msra.mxu0 0.0
        %646 = vmatpush.msra.mxu0 0.0
        %647 = vmatpush.msra.mxu0 0.0
        %648 = vmatpush.msra.mxu0 0.0
        %649 = vmatpush.msra.mxu0 0.0
        %650 = vmatpush.msra.mxu0 0.0
        %651 = vmatpush.msra.mxu0 0.0
        %652 = vmatpush.msra.mxu0 0.0
        %653 = vmatpush.msra.mxu0 0.0
        %654 = vmatpush.msra.mxu0 0.0
        %655 = vmatpush.msra.mxu0 0.0
        %656 = vmatpush.msra.mxu0 %v309
        %657 = vmatmul.f32.gmra.mxu0 %v546
        %v658 = vpop.f32.mrf.mxu0
        %v659 = vadd.f32 %v543, %v658
        %660 = vmatmul.f32.gmra.mxu0 %v549
        %v661 = vpop.f32.mrf.mxu0
        %v662 = vadd.f32 %v543, %v661
        %663 = vmatmul.f32.gmra.mxu0 %v552
        %v664 = vpop.f32.mrf.mxu0
        %v665 = vadd.f32 %v543, %v664
        %666 = vmatmul.f32.gmra.mxu0 %v555
        %v667 = vpop.f32.mrf.mxu0
        %v668 = vadd.f32 %v543, %v667
        %669 = vmatmul.f32.gmra.mxu0 %v558
        %v670 = vpop.f32.mrf.mxu0
        %v671 = vadd.f32 %v543, %v670
        %672 = vmatmul.f32.gmra.mxu0 %v561
        %v673 = vpop.f32.mrf.mxu0
        %v674 = vadd.f32 %v543, %v673
        %675 = vmatmul.f32.gmra.mxu0 %v564
        %v676 = vpop.f32.mrf.mxu0
        %v677 = vadd.f32 %v543, %v676
        %678 = vmatmul.f32.gmra.mxu0 %v567
        %v679 = vpop.f32.mrf.mxu0
        %v680 = vadd.f32 %v543, %v679
        %681 = vmatmul.f32.gmra.mxu0 %v570
        %v682 = vpop.f32.mrf.mxu0
        %v683 = vadd.f32 %v543, %v682
        %684 = vmatmul.f32.gmra.mxu0 %v573
        %v685 = vpop.f32.mrf.mxu0
        %v686 = vadd.f32 %v543, %v685
        %687 = vmatmul.f32.gmra.mxu0 %v576
        %v688 = vpop.f32.mrf.mxu0
        %v689 = vadd.f32 %v543, %v688
        %690 = vmatmul.f32.gmra.mxu0 %v579
        %v691 = vpop.f32.mrf.mxu0
        %v692 = vadd.f32 %v543, %v691
        %693 = vmatmul.f32.gmra.mxu0 %v582
        %v694 = vpop.f32.mrf.mxu0
        %v695 = vadd.f32 %v543, %v694
        %696 = vmatmul.f32.gmra.mxu0 %v585
        %v697 = vpop.f32.mrf.mxu0
        %v698 = vadd.f32 %v543, %v697
        %699 = vmatmul.f32.gmra.mxu0 %v588
        %v700 = vpop.f32.mrf.mxu0
        %v701 = vadd.f32 %v543, %v700
        %702 = vmatmul.f32.gmra.mxu0 %v591
        %v703 = vpop.f32.mrf.mxu0
        %v704 = vadd.f32 %v543, %v703
        %705 = vmatmul.f32.gmra.mxu0 %v594
        %v706 = vpop.f32.mrf.mxu0
        %v707 = vadd.f32 %v543, %v706
        %708 = vmatmul.f32.gmra.mxu0 %v597
        %v709 = vpop.f32.mrf.mxu0
        %v710 = vadd.f32 %v543, %v709
        %711 = vmatmul.f32.gmra.mxu0 %v600
        %v712 = vpop.f32.mrf.mxu0
        %v713 = vadd.f32 %v543, %v712
        %714 = vmatmul.f32.gmra.mxu0 %v603
        %v715 = vpop.f32.mrf.mxu0
        %v716 = vadd.f32 %v543, %v715
        %717 = vmatmul.f32.gmra.mxu0 %v606
        %v718 = vpop.f32.mrf.mxu0
        %v719 = vadd.f32 %v543, %v718
        %720 = vmatmul.f32.gmra.mxu0 %v609
        %v721 = vpop.f32.mrf.mxu0
        %v722 = vadd.f32 %v543, %v721
        %723 = vmatmul.f32.gmra.mxu0 %v612
        %v724 = vpop.f32.mrf.mxu0
        %v725 = vadd.f32 %v543, %v724
        %726 = vmatmul.f32.gmra.mxu0 %v615
        %v727 = vpop.f32.mrf.mxu0
        %v728 = vadd.f32 %v543, %v727
        %729 = vmatmul.f32.gmra.mxu0 %v618
        %v730 = vpop.f32.mrf.mxu0
        %v731 = vadd.f32 %v543, %v730
        %732 = vmatmul.f32.gmra.mxu0 %v621
        %v733 = vpop.f32.mrf.mxu0
        %v734 = vadd.f32 %v543, %v733
        %735 = vmatmul.f32.gmra.mxu0 %v624
        %v736 = vpop.f32.mrf.mxu0
        %v737 = vadd.f32 %v543, %v736
        %738 = vmatmul.f32.gmra.mxu0 %v627
        %v739 = vpop.f32.mrf.mxu0
        %v740 = vadd.f32 %v543, %v739
        %741 = vmatmul.f32.gmra.mxu0 %v630
        %v742 = vpop.f32.mrf.mxu0
        %v743 = vadd.f32 %v543, %v742
        %744 = vmatmul.f32.gmra.mxu0 %v633
        %v745 = vpop.f32.mrf.mxu0
        %v746 = vadd.f32 %v543, %v745
        %747 = vmatmul.f32.gmra.mxu0 %v636
        %v748 = vpop.f32.mrf.mxu0
        %v749 = vadd.f32 %v543, %v748
        %750 = vmatmul.f32.gmra.mxu0 %v639
        %v751 = vpop.f32.mrf.mxu0
        %v752 = vadd.f32 %v543, %v751
        %753 = vdwg.mxu0
        %v754 = vmax.f32 %v659, 0.0
        %v755 = vmax.f32 %v662, 0.0
        %v756 = vmax.f32 %v665, 0.0
        %v757 = vmax.f32 %v668, 0.0
        %v758 = vmax.f32 %v671, 0.0
        %v759 = vmax.f32 %v674, 0.0
        %v760 = vmax.f32 %v677, 0.0
        %v761 = vmax.f32 %v680, 0.0
        %v762 = vmax.f32 %v683, 0.0
        %v763 = vmax.f32 %v686, 0.0
        %v764 = vmax.f32 %v689, 0.0
        %v765 = vmax.f32 %v692, 0.0
        %v766 = vmax.f32 %v695, 0.0
        %v767 = vmax.f32 %v698, 0.0
        %v768 = vmax.f32 %v701, 0.0
        %v769 = vmax.f32 %v704, 0.0
        %v770 = vmax.f32 %v707, 0.0
        %v771 = vmax.f32 %v710, 0.0
        %v772 = vmax.f32 %v713, 0.0
        %v773 = vmax.f32 %v716, 0.0
        %v774 = vmax.f32 %v719, 0.0
        %v775 = vmax.f32 %v722, 0.0
        %v776 = vmax.f32 %v725, 0.0
        %v777 = vmax.f32 %v728, 0.0
        %v778 = vmax.f32 %v731, 0.0
        %v779 = vmax.f32 %v734, 0.0
        %v780 = vmax.f32 %v737, 0.0
        %v781 = vmax.f32 %v740, 0.0
        %v782 = vmax.f32 %v743, 0.0
        %v783 = vmax.f32 %v746, 0.0
        %v784 = vmax.f32 %v749, 0.0
        %v785 = vmax.f32 %v752, 0.0
        %786 = vmatpush.msra.mxu0 %v769
        %787 = vmatpush.msra.mxu0 %v768
        %788 = vmatpush.msra.mxu0 %v767
        %789 = vmatpush.msra.mxu0 %v766
        %790 = vmatpush.msra.mxu0 %v765
        %791 = vmatpush.msra.mxu0 %v764
        %792 = vmatpush.msra.mxu0 %v763
        %793 = vmatpush.msra.mxu0 %v762
        %794 = vmatpush.msra.mxu0 %v761
        %795 = vmatpush.msra.mxu0 %v760
        %796 = vmatpush.msra.mxu0 %v759
        %797 = vmatpush.msra.mxu0 %v758
        %798 = vmatpush.msra.mxu0 %v757
        %799 = vmatpush.msra.mxu0 %v756
        %800 = vmatpush.msra.mxu0 %v755
        %801 = vmatpush.msra.mxu0 %v754
        %802 = vmatmul.f32.gmra.mxu0 %v213
        %v803 = vpop.f32.mrf.mxu0
        %v804 = vadd.f32 0.0, %v803
        %805 = vmatmul.f32.gmra.mxu0 %v215
        %v806 = vpop.f32.mrf.mxu0
        %v807 = vadd.f32 0.0, %v806
        %808 = vmatmul.f32.gmra.mxu0 %v217
        %v809 = vpop.f32.mrf.mxu0
        %v810 = vadd.f32 0.0, %v809
        %811 = vmatmul.f32.gmra.mxu0 %v219
        %v812 = vpop.f32.mrf.mxu0
        %v813 = vadd.f32 0.0, %v812
        %814 = vmatmul.f32.gmra.mxu0 %v221
        %v815 = vpop.f32.mrf.mxu0
        %v816 = vadd.f32 0.0, %v815
        %817 = vmatmul.f32.gmra.mxu0 %v223
        %v818 = vpop.f32.mrf.mxu0
        %v819 = vadd.f32 0.0, %v818
        %820 = vmatmul.f32.gmra.mxu0 %v225
        %v821 = vpop.f32.mrf.mxu0
        %v822 = vadd.f32 0.0, %v821
        %823 = vmatmul.f32.gmra.mxu0 %v227
        %v824 = vpop.f32.mrf.mxu0
        %v825 = vadd.f32 0.0, %v824
        %826 = vmatmul.f32.gmra.mxu0 %v229
        %v827 = vpop.f32.mrf.mxu0
        %v828 = vadd.f32 0.0, %v827
        %829 = vmatmul.f32.gmra.mxu0 %v231
        %v830 = vpop.f32.mrf.mxu0
        %v831 = vadd.f32 0.0, %v830
        %832 = vmatmul.f32.gmra.mxu0 %v233
        %v833 = vpop.f32.mrf.mxu0
        %v834 = vadd.f32 0.0, %v833
        %835 = vmatmul.f32.gmra.mxu0 %v235
        %v836 = vpop.f32.mrf.mxu0
        %v837 = vadd.f32 0.0, %v836
        %838 = vmatmul.f32.gmra.mxu0 %v237
        %v839 = vpop.f32.mrf.mxu0
        %v840 = vadd.f32 0.0, %v839
        %841 = vmatmul.f32.gmra.mxu0 %v239
        %v842 = vpop.f32.mrf.mxu0
        %v843 = vadd.f32 0.0, %v842
        %844 = vmatmul.f32.gmra.mxu0 %v241
        %v845 = vpop.f32.mrf.mxu0
        %v846 = vadd.f32 0.0, %v845
        %847 = vmatmul.f32.gmra.mxu0 %v243
        %v848 = vpop.f32.mrf.mxu0
        %v849 = vadd.f32 0.0, %v848
        %850 = vmatmul.f32.gmra.mxu0 %v245
        %v851 = vpop.f32.mrf.mxu0
        %v852 = vadd.f32 0.0, %v851
        %853 = vmatmul.f32.gmra.mxu0 %v247
        %v854 = vpop.f32.mrf.mxu0
        %v855 = vadd.f32 0.0, %v854
        %856 = vmatmul.f32.gmra.mxu0 %v249
        %v857 = vpop.f32.mrf.mxu0
        %v858 = vadd.f32 0.0, %v857
        %859 = vmatmul.f32.gmra.mxu0 %v251
        %v860 = vpop.f32.mrf.mxu0
        %v861 = vadd.f32 0.0, %v860
        %862 = vmatmul.f32.gmra.mxu0 %v253
        %v863 = vpop.f32.mrf.mxu0
        %v864 = vadd.f32 0.0, %v863
        %865 = vmatmul.f32.gmra.mxu0 %v255
        %v866 = vpop.f32.mrf.mxu0
        %v867 = vadd.f32 0.0, %v866
        %868 = vmatmul.f32.gmra.mxu0 %v257
        %v869 = vpop.f32.mrf.mxu0
        %v870 = vadd.f32 0.0, %v869
        %871 = vmatmul.f32.gmra.mxu0 %v259
        %v872 = vpop.f32.mrf.mxu0
        %v873 = vadd.f32 0.0, %v872
        %874 = vmatmul.f32.gmra.mxu0 %v261
        %v875 = vpop.f32.mrf.mxu0
        %v876 = vadd.f32 0.0, %v875
        %877 = vmatmul.f32.gmra.mxu0 %v263
        %v878 = vpop.f32.mrf.mxu0
        %v879 = vadd.f32 0.0, %v878
        %880 = vmatmul.f32.gmra.mxu0 %v265
        %v881 = vpop.f32.mrf.mxu0
        %v882 = vadd.f32 0.0, %v881
        %883 = vmatmul.f32.gmra.mxu0 %v267
        %v884 = vpop.f32.mrf.mxu0
        %v885 = vadd.f32 0.0, %v884
        %886 = vmatmul.f32.gmra.mxu0 %v269
        %v887 = vpop.f32.mrf.mxu0
        %v888 = vadd.f32 0.0, %v887
        %889 = vmatmul.f32.gmra.mxu0 %v271
        %v890 = vpop.f32.mrf.mxu0
        %v891 = vadd.f32 0.0, %v890
        %892 = vmatmul.f32.gmra.mxu0 %v273
        %v893 = vpop.f32.mrf.mxu0
        %v894 = vadd.f32 0.0, %v893
        %895 = vmatmul.f32.gmra.mxu0 %v275
        %v896 = vpop.f32.mrf.mxu0
        %v897 = vadd.f32 0.0, %v896
        %898 = vdwg.mxu0
        %899 = vmatpush.msra.mxu0 %v785
        %900 = vmatpush.msra.mxu0 %v784
        %901 = vmatpush.msra.mxu0 %v783
        %902 = vmatpush.msra.mxu0 %v782
        %903 = vmatpush.msra.mxu0 %v781
        %904 = vmatpush.msra.mxu0 %v780
        %905 = vmatpush.msra.mxu0 %v779
        %906 = vmatpush.msra.mxu0 %v778
        %907 = vmatpush.msra.mxu0 %v777
        %908 = vmatpush.msra.mxu0 %v776
        %909 = vmatpush.msra.mxu0 %v775
        %910 = vmatpush.msra.mxu0 %v774
        %911 = vmatpush.msra.mxu0 %v773
        %912 = vmatpush.msra.mxu0 %v772
        %913 = vmatpush.msra.mxu0 %v771
        %914 = vmatpush.msra.mxu0 %v770
        %915 = vmatmul.f32.gmra.mxu0 %v214
        %v916 = vpop.f32.mrf.mxu0
        %v917 = vadd.f32 %v804, %v916
        %918 = vmatmul.f32.gmra.mxu0 %v216
        %v919 = vpop.f32.mrf.mxu0
        %v920 = vadd.f32 %v807, %v919
        %921 = vmatmul.f32.gmra.mxu0 %v218
        %v922 = vpop.f32.mrf.mxu0
        %v923 = vadd.f32 %v810, %v922
        %924 = vmatmul.f32.gmra.mxu0 %v220
        %v925 = vpop.f32.mrf.mxu0
        %v926 = vadd.f32 %v813, %v925
        %927 = vmatmul.f32.gmra.mxu0 %v222
        %v928 = vpop.f32.mrf.mxu0
        %v929 = vadd.f32 %v816, %v928
        %930 = vmatmul.f32.gmra.mxu0 %v224
        %v931 = vpop.f32.mrf.mxu0
        %v932 = vadd.f32 %v819, %v931
        %933 = vmatmul.f32.gmra.mxu0 %v226
        %v934 = vpop.f32.mrf.mxu0
        %v935 = vadd.f32 %v822, %v934
        %936 = vmatmul.f32.gmra.mxu0 %v228
        %v937 = vpop.f32.mrf.mxu0
        %v938 = vadd.f32 %v825, %v937
        %939 = vmatmul.f32.gmra.mxu0 %v230
        %v940 = vpop.f32.mrf.mxu0
        %v941 = vadd.f32 %v828, %v940
        %942 = vmatmul.f32.gmra.mxu0 %v232
        %v943 = vpop.f32.mrf.mxu0
        %v944 = vadd.f32 %v831, %v943
        %945 = vmatmul.f32.gmra.mxu0 %v234
        %v946 = vpop.f32.mrf.mxu0
        %v947 = vadd.f32 %v834, %v946
        %948 = vmatmul.f32.gmra.mxu0 %v236
        %v949 = vpop.f32.mrf.mxu0
        %v950 = vadd.f32 %v837, %v949
        %951 = vmatmul.f32.gmra.mxu0 %v238
        %v952 = vpop.f32.mrf.mxu0
        %v953 = vadd.f32 %v840, %v952
        %954 = vmatmul.f32.gmra.mxu0 %v240
        %v955 = vpop.f32.mrf.mxu0
        %v956 = vadd.f32 %v843, %v955
        %957 = vmatmul.f32.gmra.mxu0 %v242
        %v958 = vpop.f32.mrf.mxu0
        %v959 = vadd.f32 %v846, %v958
        %960 = vmatmul.f32.gmra.mxu0 %v244
        %v961 = vpop.f32.mrf.mxu0
        %v962 = vadd.f32 %v849, %v961
        %963 = vmatmul.f32.gmra.mxu0 %v246
        %v964 = vpop.f32.mrf.mxu0
        %v965 = vadd.f32 %v852, %v964
        %966 = vmatmul.f32.gmra.mxu0 %v248
        %v967 = vpop.f32.mrf.mxu0
        %v968 = vadd.f32 %v855, %v967
        %969 = vmatmul.f32.gmra.mxu0 %v250
        %v970 = vpop.f32.mrf.mxu0
        %v971 = vadd.f32 %v858, %v970
        %972 = vmatmul.f32.gmra.mxu0 %v252
        %v973 = vpop.f32.mrf.mxu0
        %v974 = vadd.f32 %v861, %v973
        %975 = vmatmul.f32.gmra.mxu0 %v254
        %v976 = vpop.f32.mrf.mxu0
        %v977 = vadd.f32 %v864, %v976
        %978 = vmatmul.f32.gmra.mxu0 %v256
        %v979 = vpop.f32.mrf.mxu0
        %v980 = vadd.f32 %v867, %v979
        %981 = vmatmul.f32.gmra.mxu0 %v258
        %v982 = vpop.f32.mrf.mxu0
        %v983 = vadd.f32 %v870, %v982
        %984 = vmatmul.f32.gmra.mxu0 %v260
        %v985 = vpop.f32.mrf.mxu0
        %v986 = vadd.f32 %v873, %v985
        %987 = vmatmul.f32.gmra.mxu0 %v262
        %v988 = vpop.f32.mrf.mxu0
        %v989 = vadd.f32 %v876, %v988
        %990 = vmatmul.f32.gmra.mxu0 %v264
        %v991 = vpop.f32.mrf.mxu0
        %v992 = vadd.f32 %v879, %v991
        %993 = vmatmul.f32.gmra.mxu0 %v266
        %v994 = vpop.f32.mrf.mxu0
        %v995 = vadd.f32 %v882, %v994
        %996 = vmatmul.f32.gmra.mxu0 %v268
        %v997 = vpop.f32.mrf.mxu0
        %v998 = vadd.f32 %v885, %v997
        %999 = vmatmul.f32.gmra.mxu0 %v270
        %v1000 = vpop.f32.mrf.mxu0
        %v1001 = vadd.f32 %v888, %v1000
        %1002 = vmatmul.f32.gmra.mxu0 %v272
        %v1003 = vpop.f32.mrf.mxu0
        %v1004 = vadd.f32 %v891, %v1003
        %1005 = vmatmul.f32.gmra.mxu0 %v274
        %v1006 = vpop.f32.mrf.mxu0
        %v1007 = vadd.f32 %v894, %v1006
        %1008 = vmatmul.f32.gmra.mxu0 %v276
        %v1009 = vpop.f32.mrf.mxu0
        %v1010 = vadd.f32 %v897, %v1009
        %1011 = vdwg.mxu0
        %v1012 = vperm.slane %v311, 0
        %vm1013 = vcmask 130048
        %v1015 = vsel %vm1013, %v917, 0
        %v1018 = vsel %vm1013, %v920, 0
        %v1021 = vsel %vm1013, %v923, 0
        %v1024 = vsel %vm1013, %v926, 0
        %v1027 = vsel %vm1013, %v929, 0
        %v1030 = vsel %vm1013, %v932, 0
        %v1033 = vsel %vm1013, %v935, 0
        %v1036 = vsel %vm1013, %v938, 0
        %v1039 = vsel %vm1013, %v941, 0
        %v1042 = vsel %vm1013, %v944, 0
        %v1045 = vsel %vm1013, %v947, 0
        %v1048 = vsel %vm1013, %v950, 0
        %v1051 = vsel %vm1013, %v953, 0
        %v1054 = vsel %vm1013, %v956, 0
        %v1057 = vsel %vm1013, %v959, 0
        %v1060 = vsel %vm1013, %v962, 0
        %v1063 = vsel %vm1013, %v965, 0
        %v1066 = vsel %vm1013, %v968, 0
        %v1069 = vsel %vm1013, %v971, 0
        %v1072 = vsel %vm1013, %v974, 0
        %v1075 = vsel %vm1013, %v977, 0
        %v1078 = vsel %vm1013, %v980, 0
        %v1081 = vsel %vm1013, %v983, 0
        %v1084 = vsel %vm1013, %v986, 0
        %v1087 = vsel %vm1013, %v989, 0
        %v1090 = vsel %vm1013, %v992, 0
        %v1093 = vsel %vm1013, %v995, 0
        %v1096 = vsel %vm1013, %v998, 0
        %v1099 = vsel %vm1013, %v1001, 0
        %v1102 = vsel %vm1013, %v1004, 0
        %v1105 = vsel %vm1013, %v1007, 0
        %v1108 = vsel %vm1013, %v1010, 0
        %1110 = vmatpush.msra.mxu0 0.0
        %1111 = vmatpush.msra.mxu0 0.0
        %1112 = vmatpush.msra.mxu0 0.0
        %1113 = vmatpush.msra.mxu0 0.0
        %1114 = vmatpush.msra.mxu0 0.0
        %1115 = vmatpush.msra.mxu0 0.0
        %1116 = vmatpush.msra.mxu0 0.0
        %1117 = vmatpush.msra.mxu0 0.0
        %1118 = vmatpush.msra.mxu0 0.0
        %1119 = vmatpush.msra.mxu0 0.0
        %1120 = vmatpush.msra.mxu0 0.0
        %1121 = vmatpush.msra.mxu0 0.0
        %1122 = vmatpush.msra.mxu0 0.0
        %1123 = vmatpush.msra.mxu0 0.0
        %1124 = vmatpush.msra.mxu0 %v314
        %1125 = vmatpush.msra.mxu0 %v313
        %1126 = vmatmul.f32.gmra.mxu0 %v1015
        %v1127 = vpop.f32.mrf.mxu0
        %v1128 = vadd.f32 %v1012, %v1127
        %1129 = vmatmul.f32.gmra.mxu0 %v1018
        %v1130 = vpop.f32.mrf.mxu0
        %v1131 = vadd.f32 %v1012, %v1130
        %1132 = vmatmul.f32.gmra.mxu0 %v1021
        %v1133 = vpop.f32.mrf.mxu0
        %v1134 = vadd.f32 %v1012, %v1133
        %1135 = vmatmul.f32.gmra.mxu0 %v1024
        %v1136 = vpop.f32.mrf.mxu0
        %v1137 = vadd.f32 %v1012, %v1136
        %1138 = vmatmul.f32.gmra.mxu0 %v1027
        %v1139 = vpop.f32.mrf.mxu0
        %v1140 = vadd.f32 %v1012, %v1139
        %1141 = vmatmul.f32.gmra.mxu0 %v1030
        %v1142 = vpop.f32.mrf.mxu0
        %v1143 = vadd.f32 %v1012, %v1142
        %1144 = vmatmul.f32.gmra.mxu0 %v1033
        %v1145 = vpop.f32.mrf.mxu0
        %v1146 = vadd.f32 %v1012, %v1145
        %1147 = vmatmul.f32.gmra.mxu0 %v1036
        %v1148 = vpop.f32.mrf.mxu0
        %v1149 = vadd.f32 %v1012, %v1148
        %1150 = vmatmul.f32.gmra.mxu0 %v1039
        %v1151 = vpop.f32.mrf.mxu0
        %v1152 = vadd.f32 %v1012, %v1151
        %1153 = vmatmul.f32.gmra.mxu0 %v1042
        %v1154 = vpop.f32.mrf.mxu0
        %v1155 = vadd.f32 %v1012, %v1154
        %1156 = vmatmul.f32.gmra.mxu0 %v1045
        %v1157 = vpop.f32.mrf.mxu0
        %v1158 = vadd.f32 %v1012, %v1157
        %1159 = vmatmul.f32.gmra.mxu0 %v1048
        %v1160 = vpop.f32.mrf.mxu0
        %v1161 = vadd.f32 %v1012, %v1160
        %1162 = vmatmul.f32.gmra.mxu0 %v1051
        %v1163 = vpop.f32.mrf.mxu0
        %v1164 = vadd.f32 %v1012, %v1163
        %1165 = vmatmul.f32.gmra.mxu0 %v1054
        %v1166 = vpop.f32.mrf.mxu0
        %v1167 = vadd.f32 %v1012, %v1166
        %1168 = vmatmul.f32.gmra.mxu0 %v1057
        %v1169 = vpop.f32.mrf.mxu0
        %v1170 = vadd.f32 %v1012, %v1169
        %1171 = vmatmul.f32.gmra.mxu0 %v1060
        %v1172 = vpop.f32.mrf.mxu0
        %v1173 = vadd.f32 %v1012, %v1172
        %1174 = vmatmul.f32.gmra.mxu0 %v1063
        %v1175 = vpop.f32.mrf.mxu0
        %v1176 = vadd.f32 %v1012, %v1175
        %1177 = vmatmul.f32.gmra.mxu0 %v1066
        %v1178 = vpop.f32.mrf.mxu0
        %v1179 = vadd.f32 %v1012, %v1178
        %1180 = vmatmul.f32.gmra.mxu0 %v1069
        %v1181 = vpop.f32.mrf.mxu0
        %v1182 = vadd.f32 %v1012, %v1181
        %1183 = vmatmul.f32.gmra.mxu0 %v1072
        %v1184 = vpop.f32.mrf.mxu0
        %v1185 = vadd.f32 %v1012, %v1184
        %1186 = vmatmul.f32.gmra.mxu0 %v1075
        %v1187 = vpop.f32.mrf.mxu0
        %v1188 = vadd.f32 %v1012, %v1187
        %1189 = vmatmul.f32.gmra.mxu0 %v1078
        %v1190 = vpop.f32.mrf.mxu0
        %v1191 = vadd.f32 %v1012, %v1190
        %1192 = vmatmul.f32.gmra.mxu0 %v1081
        %v1193 = vpop.f32.mrf.mxu0
        %v1194 = vadd.f32 %v1012, %v1193
        %1195 = vmatmul.f32.gmra.mxu0 %v1084
        %v1196 = vpop.f32.mrf.mxu0
        %v1197 = vadd.f32 %v1012, %v1196
        %1198 = vmatmul.f32.gmra.mxu0 %v1087
        %v1199 = vpop.f32.mrf.mxu0
        %v1200 = vadd.f32 %v1012, %v1199
        %1201 = vmatmul.f32.gmra.mxu0 %v1090
        %v1202 = vpop.f32.mrf.mxu0
        %v1203 = vadd.f32 %v1012, %v1202
        %1204 = vmatmul.f32.gmra.mxu0 %v1093
        %v1205 = vpop.f32.mrf.mxu0
        %v1206 = vadd.f32 %v1012, %v1205
        %1207 = vmatmul.f32.gmra.mxu0 %v1096
        %v1208 = vpop.f32.mrf.mxu0
        %v1209 = vadd.f32 %v1012, %v1208
        %1210 = vmatmul.f32.gmra.mxu0 %v1099
        %v1211 = vpop.f32.mrf.mxu0
        %v1212 = vadd.f32 %v1012, %v1211
        %1213 = vmatmul.f32.gmra.mxu0 %v1102
        %v1214 = vpop.f32.mrf.mxu0
        %v1215 = vadd.f32 %v1012, %v1214
        %1216 = vmatmul.f32.gmra.mxu0 %v1105
        %v1217 = vpop.f32.mrf.mxu0
        %v1218 = vadd.f32 %v1012, %v1217
        %1219 = vmatmul.f32.gmra.mxu0 %v1108
        %v1220 = vpop.f32.mrf.mxu0
        %v1221 = vadd.f32 %v1012, %v1220
        %1222 = vdwg.mxu0
        %v1223 = vmax.f32 %v1128, 0.0
        %v1224 = vmax.f32 %v1131, 0.0
        %v1225 = vmax.f32 %v1134, 0.0
        %v1226 = vmax.f32 %v1137, 0.0
        %v1227 = vmax.f32 %v1140, 0.0
        %v1228 = vmax.f32 %v1143, 0.0
        %v1229 = vmax.f32 %v1146, 0.0
        %v1230 = vmax.f32 %v1149, 0.0
        %v1231 = vmax.f32 %v1152, 0.0
        %v1232 = vmax.f32 %v1155, 0.0
        %v1233 = vmax.f32 %v1158, 0.0
        %v1234 = vmax.f32 %v1161, 0.0
        %v1235 = vmax.f32 %v1164, 0.0
        %v1236 = vmax.f32 %v1167, 0.0
        %v1237 = vmax.f32 %v1170, 0.0
        %v1238 = vmax.f32 %v1173, 0.0
        %v1239 = vmax.f32 %v1176, 0.0
        %v1240 = vmax.f32 %v1179, 0.0
        %v1241 = vmax.f32 %v1182, 0.0
        %v1242 = vmax.f32 %v1185, 0.0
        %v1243 = vmax.f32 %v1188, 0.0
        %v1244 = vmax.f32 %v1191, 0.0
        %v1245 = vmax.f32 %v1194, 0.0
        %v1246 = vmax.f32 %v1197, 0.0
        %v1247 = vmax.f32 %v1200, 0.0
        %v1248 = vmax.f32 %v1203, 0.0
        %v1249 = vmax.f32 %v1206, 0.0
        %v1250 = vmax.f32 %v1209, 0.0
        %v1251 = vmax.f32 %v1212, 0.0
        %v1252 = vmax.f32 %v1215, 0.0
        %v1253 = vmax.f32 %v1218, 0.0
        %v1254 = vmax.f32 %v1221, 0.0
        %v1255 = vlaneseq
        %v1256 = vshrl.u32 %v1255, 7
        %v1257 = vadd.s32 %v1256, 8
        %v1258 = vadd.s32 %v1256, 16
        %v1259 = vadd.s32 %v1256, 24
        %v1260 = vlaneseq
        %v1261 = vand.u32 %v1260, 127
        %v1262 = vadd.s32 %v1261, 128
        %v1263 = vmul.u32 %v1256, 8
        %v1264 = vmul.u32 %v1257, 8
        %v1265 = vmul.u32 %v1258, 8
        %v1266 = vmul.u32 %v1259, 8
        %v1267 = vsub.s32 %v1261, %v1263
        %v1268 = vsub.s32 %v1262, %v1263
        %v1269 = vsub.s32 %v1261, %v1264
        %v1270 = vsub.s32 %v1262, %v1264
        %v1271 = vsub.s32 %v1261, %v1265
        %v1272 = vsub.s32 %v1262, %v1265
        %v1273 = vsub.s32 %v1261, %v1266
        %v1274 = vsub.s32 %v1262, %v1266
        %vm1275 = vcmp.ge.s32.totalorder %v1267, 0
        %vm1276 = vcmp.ge.s32.totalorder %v1268, 0
        %vm1277 = vcmp.ge.s32.totalorder %v1269, 0
        %vm1278 = vcmp.ge.s32.totalorder %v1270, 0
        %vm1279 = vcmp.ge.s32.totalorder %v1271, 0
        %vm1280 = vcmp.ge.s32.totalorder %v1272, 0
        %vm1281 = vcmp.ge.s32.totalorder %v1273, 0
        %vm1282 = vcmp.ge.s32.totalorder %v1274, 0
        %vm1283 = vcmp.lt.s32.totalorder %v1267, 8
        %vm1284 = vcmp.lt.s32.totalorder %v1268, 8
        %vm1285 = vcmp.lt.s32.totalorder %v1269, 8
        %vm1286 = vcmp.lt.s32.totalorder %v1270, 8
        %vm1287 = vcmp.lt.s32.totalorder %v1271, 8
        %vm1288 = vcmp.lt.s32.totalorder %v1272, 8
        %vm1289 = vcmp.lt.s32.totalorder %v1273, 8
        %vm1290 = vcmp.lt.s32.totalorder %v1274, 8
        %vm1291 = vmand %vm1275, %vm1283
        %vm1292 = vmand %vm1276, %vm1284
        %vm1293 = vmand %vm1277, %vm1285
        %vm1294 = vmand %vm1278, %vm1286
        %vm1295 = vmand %vm1279, %vm1287
        %vm1296 = vmand %vm1280, %vm1288
        %vm1297 = vmand %vm1281, %vm1289
        %vm1298 = vmand %vm1282, %vm1290
        %v1299 = vsel %vm1291, 1, 0
        %v1300 = vsel %vm1292, 1, 0
        %v1301 = vsel %vm1293, 1, 0
        %v1302 = vsel %vm1294, 1, 0
        %v1303 = vsel %vm1295, 1, 0
        %v1304 = vsel %vm1296, 1, 0
        %v1305 = vsel %vm1297, 1, 0
        %v1306 = vsel %vm1298, 1, 0
        %v1307 = vcvt.s32.f32 %v1299
        %v1308 = vcvt.s32.f32 %v1300
        %v1309 = vcvt.s32.f32 %v1301
        %v1310 = vcvt.s32.f32 %v1302
        %v1311 = vcvt.s32.f32 %v1303
        %v1312 = vcvt.s32.f32 %v1304
        %v1313 = vcvt.s32.f32 %v1305
        %v1314 = vcvt.s32.f32 %v1306
        %1315 = vmatpush.msra.mxu0 %v1238
        %1316 = vmatpush.msra.mxu0 %v1237
        %1317 = vmatpush.msra.mxu0 %v1236
        %1318 = vmatpush.msra.mxu0 %v1235
        %1319 = vmatpush.msra.mxu0 %v1234
        %1320 = vmatpush.msra.mxu0 %v1233
        %1321 = vmatpush.msra.mxu0 %v1232
        %1322 = vmatpush.msra.mxu0 %v1231
        %1323 = vmatpush.msra.mxu0 %v1230
        %1324 = vmatpush.msra.mxu0 %v1229
        %1325 = vmatpush.msra.mxu0 %v1228
        %1326 = vmatpush.msra.mxu0 %v1227
        %1327 = vmatpush.msra.mxu0 %v1226
        %1328 = vmatpush.msra.mxu0 %v1225
        %1329 = vmatpush.msra.mxu0 %v1224
        %1330 = vmatpush.msra.mxu0 %v1223
        %1331 = vmatmul.f32.gmra.mxu0 %v1307
        %v1332 = vpop.f32.mrf.mxu0
        %v1333 = vadd.f32 0.0, %v1332
        %1334 = vmatmul.f32.gmra.mxu0 %v1309
        %v1335 = vpop.f32.mrf.mxu0
        %v1336 = vadd.f32 0.0, %v1335
        %1337 = vmatmul.f32.gmra.mxu0 %v1311
        %v1338 = vpop.f32.mrf.mxu0
        %v1339 = vadd.f32 0.0, %v1338
        %1340 = vmatmul.f32.gmra.mxu0 %v1313
        %v1341 = vpop.f32.mrf.mxu0
        %v1342 = vadd.f32 0.0, %v1341
        %1343 = vdwg.mxu0
        %1344 = vmatpush.msra.mxu0 %v1254
        %1345 = vmatpush.msra.mxu0 %v1253
        %1346 = vmatpush.msra.mxu0 %v1252
        %1347 = vmatpush.msra.mxu0 %v1251
        %1348 = vmatpush.msra.mxu0 %v1250
        %1349 = vmatpush.msra.mxu0 %v1249
        %1350 = vmatpush.msra.mxu0 %v1248
        %1351 = vmatpush.msra.mxu0 %v1247
        %1352 = vmatpush.msra.mxu0 %v1246
        %1353 = vmatpush.msra.mxu0 %v1245
        %1354 = vmatpush.msra.mxu0 %v1244
        %1355 = vmatpush.msra.mxu0 %v1243
        %1356 = vmatpush.msra.mxu0 %v1242
        %1357 = vmatpush.msra.mxu0 %v1241
        %1358 = vmatpush.msra.mxu0 %v1240
        %1359 = vmatpush.msra.mxu0 %v1239
        %1360 = vmatmul.f32.gmra.mxu0 %v1308
        %v1361 = vpop.f32.mrf.mxu0
        %v1362 = vadd.f32 %v1333, %v1361
        %1363 = vmatmul.f32.gmra.mxu0 %v1310
        %v1364 = vpop.f32.mrf.mxu0
        %v1365 = vadd.f32 %v1336, %v1364
        %1366 = vmatmul.f32.gmra.mxu0 %v1312
        %v1367 = vpop.f32.mrf.mxu0
        %v1368 = vadd.f32 %v1339, %v1367
        %1369 = vmatmul.f32.gmra.mxu0 %v1314
        %v1370 = vpop.f32.mrf.mxu0
        %v1371 = vadd.f32 %v1342, %v1370
        %1372 = vdwg.mxu0
        %v1373 = vperm.slane %v312, 0
        %v1375 = vsel %vm1013, %v1362, 0
        %v1378 = vsel %vm1013, %v1365, 0
        %v1381 = vsel %vm1013, %v1368, 0
        %v1384 = vsel %vm1013, %v1371, 0
        %1386 = vmatpush.msra.mxu0 0.0
        %1387 = vmatpush.msra.mxu0 0.0
        %1388 = vmatpush.msra.mxu0 0.0
        %1389 = vmatpush.msra.mxu0 0.0
        %1390 = vmatpush.msra.mxu0 0.0
        %1391 = vmatpush.msra.mxu0 0.0
        %1392 = vmatpush.msra.mxu0 0.0
        %1393 = vmatpush.msra.mxu0 0.0
        %1394 = vmatpush.msra.mxu0 0.0
        %1395 = vmatpush.msra.mxu0 0.0
        %1396 = vmatpush.msra.mxu0 0.0
        %1397 = vmatpush.msra.mxu0 0.0
        %1398 = vmatpush.msra.mxu0 0.0
        %1399 = vmatpush.msra.mxu0 0.0
        %1400 = vmatpush.msra.mxu0 %v316
        %1401 = vmatpush.msra.mxu0 %v315
        %1402 = vmatmul.f32.gmra.mxu0 %v1375
        %v1403 = vpop.f32.mrf.mxu0
        %v1404 = vadd.f32 %v1373, %v1403
        %1405 = vmatmul.f32.gmra.mxu0 %v1378
        %v1406 = vpop.f32.mrf.mxu0
        %v1407 = vadd.f32 %v1373, %v1406
        %1408 = vmatmul.f32.gmra.mxu0 %v1381
        %v1409 = vpop.f32.mrf.mxu0
        %v1410 = vadd.f32 %v1373, %v1409
        %1411 = vmatmul.f32.gmra.mxu0 %v1384
        %v1412 = vpop.f32.mrf.mxu0
        %v1413 = vadd.f32 %v1373, %v1412
        %1414 = vdwg.mxu0
        %vm1415 = vcmp.lt.s32.totalorder %v1261, 0
        %v1416 = vsub.s32 0, %v1261
        %v1417 = vsel %vm1415, %v1416, %v1261
        %v1418 = vshrl.u32 %v1417, 3
        %v1419 = vand.u32 %v1417, 7
        %v1420 = vsub.s32 0, %v1419
        %v1421 = vsel %vm1415, %v1420, %v1419
        %vm1422 = vcmp.ne.s32.totalorder %v1421, 0
        %vm1423 = vcmp.lt.s32.totalorder %v1421, 0
        %vm1424 = vmand %vm1423, %vm1422
        %v1425 = vadd.s32 %v1421, 8
        %v1426 = vsel %vm1424, %v1425, %v1421
        %vm1427 = vcmp.lt.s32.totalorder %v1426, 7
        %vm1428 = vcmp.ge.s32.totalorder %v1261, 8
        %v1429 = vsel %vm1427, 1, 0
        %vm1430 = vcmp.eq.s32.totalorder %v1429, 1
        %v1431 = vsel %vm1430, %v1404, -inf
        %v1432 = vsel %vm1430, %v1407, -inf
        %v1433 = vsel %vm1430, %v1410, -inf
        %v1434 = vsel %vm1430, %v1413, -inf
        %v1435 = vsel %vm1428, 1, 0
        %vm1436 = vcmp.eq.s32.totalorder %v1435, 1
        %v1437 = vsel %vm1436, -inf, %v1431
        %v1438 = vsel %vm1436, -inf, %v1432
        %v1439 = vsel %vm1436, -inf, %v1433
        %v1440 = vsel %vm1436, -inf, %v1434
        %v1441 = vsel %vm1013, %v1437, -inf
        %1442 = vmax.xlane.f32.xlu0 %v1441
        %v1443 = vpop.xlane.xlu0 %1442
        %v1444 = vsel %vm1013, %v1438, -inf
        %1445 = vmax.xlane.f32.xlu0 %v1444
        %v1446 = vpop.xlane.xlu0 %1445
        %v1447 = vsel %vm1013, %v1439, -inf
        %1448 = vmax.xlane.f32.xlu0 %v1447
        %v1449 = vpop.xlane.xlu0 %1448
        %v1450 = vsel %vm1013, %v1440, -inf
        %1451 = vmax.xlane.f32.xlu0 %v1450
        %v1452 = vpop.xlane.xlu0 %1451
        %v1453 = vsel %vm1436, %v1431, -inf
        %v1454 = vsel %vm1436, %v1432, -inf
        %v1455 = vsel %vm1436, %v1433, -inf
        %v1456 = vsel %vm1436, %v1434, -inf
        %v1457 = vsel %vm1013, %v1453, -inf
        %1458 = vmax.xlane.f32.xlu0 %v1457
        %v1459 = vpop.xlane.xlu0 %1458
        %v1460 = vsel %vm1013, %v1454, -inf
        %1461 = vmax.xlane.f32.xlu0 %v1460
        %v1462 = vpop.xlane.xlu0 %1461
        %v1463 = vsel %vm1013, %v1455, -inf
        %1464 = vmax.xlane.f32.xlu0 %v1463
        %v1465 = vpop.xlane.xlu0 %1464
        %v1466 = vsel %vm1013, %v1456, -inf
        %1467 = vmax.xlane.f32.xlu0 %v1466
        %v1468 = vpop.xlane.xlu0 %1467
        %v1469 = vsel %vm1436, %v1459, %v1443
        %v1470 = vsel %vm1436, %v1462, %v1446
        %v1471 = vsel %vm1436, %v1465, %v1449
        %v1472 = vsel %vm1436, %v1468, %v1452
        %v1473 = vsub.f32 %v1404, %v1469
        %v1474 = vsub.f32 %v1407, %v1470
        %v1475 = vsub.f32 %v1410, %v1471
        %v1476 = vsub.f32 %v1413, %v1472
        %v1477 = vmul.f32 %v1473, 1.442695
        %v1478 = vpow.pop %v1477
        %v1479 = vmul.f32 %v1474, 1.442695
        %v1480 = vpow.pop %v1479
        %v1481 = vmul.f32 %v1475, 1.442695
        %v1482 = vpow.pop %v1481
        %v1483 = vmul.f32 %v1476, 1.442695
        %v1484 = vpow.pop %v1483
        %v1485 = vsel %vm1430, %v1478, 0.0
        %v1486 = vsel %vm1430, %v1480, 0.0
        %v1487 = vsel %vm1430, %v1482, 0.0
        %v1488 = vsel %vm1430, %v1484, 0.0
        %v1489 = vsel %vm1436, 0.0, %v1485
        %v1490 = vsel %vm1436, 0.0, %v1486
        %v1491 = vsel %vm1436, 0.0, %v1487
        %v1492 = vsel %vm1436, 0.0, %v1488
        %v1493 = vsel %vm1013, %v1489, 0.0
        %1494 = vadd.xlane.f32.xlu0 %v1493
        %v1495 = vpop.xlane.xlu0 %1494
        %v1496 = vsel %vm1013, %v1490, 0.0
        %1497 = vadd.xlane.f32.xlu0 %v1496
        %v1498 = vpop.xlane.xlu0 %1497
        %v1499 = vsel %vm1013, %v1491, 0.0
        %1500 = vadd.xlane.f32.xlu0 %v1499
        %v1501 = vpop.xlane.xlu0 %1500
        %v1502 = vsel %vm1013, %v1492, 0.0
        %1503 = vadd.xlane.f32.xlu0 %v1502
        %v1504 = vpop.xlane.xlu0 %1503
        %v1505 = vsel %vm1436, %v1485, 0.0
        %v1506 = vsel %vm1436, %v1486, 0.0
        %v1507 = vsel %vm1436, %v1487, 0.0
        %v1508 = vsel %vm1436, %v1488, 0.0
        %v1509 = vsel %vm1013, %v1505, 0.0
        %1510 = vadd.xlane.f32.xlu0 %v1509
        %v1511 = vpop.xlane.xlu0 %1510
        %v1512 = vsel %vm1013, %v1506, 0.0
        %1513 = vadd.xlane.f32.xlu0 %v1512
        %v1514 = vpop.xlane.xlu0 %1513
        %v1515 = vsel %vm1013, %v1507, 0.0
        %1516 = vadd.xlane.f32.xlu0 %v1515
        %v1517 = vpop.xlane.xlu0 %1516
        %v1518 = vsel %vm1013, %v1508, 0.0
        %1519 = vadd.xlane.f32.xlu0 %v1518
        %v1520 = vpop.xlane.xlu0 %1519
        %v1521 = vlog2.pop %v1511
        %v1522 = vmul.f32 %v1521, 0.6931472
        %v1523 = vlog2.pop %v1514
        %v1524 = vmul.f32 %v1523, 0.6931472
        %v1525 = vlog2.pop %v1517
        %v1526 = vmul.f32 %v1525, 0.6931472
        %v1527 = vlog2.pop %v1520
        %v1528 = vmul.f32 %v1527, 0.6931472
        %v1529 = vlog2.pop %v1495
        %v1530 = vmul.f32 %v1529, 0.6931472
        %v1531 = vlog2.pop %v1498
        %v1532 = vmul.f32 %v1531, 0.6931472
        %v1533 = vlog2.pop %v1501
        %v1534 = vmul.f32 %v1533, 0.6931472
        %v1535 = vlog2.pop %v1504
        %v1536 = vmul.f32 %v1535, 0.6931472
        %v1537 = vsel %vm1436, %v1522, %v1530
        %v1538 = vsel %vm1436, %v1524, %v1532
        %v1539 = vsel %vm1436, %v1526, %v1534
        %v1540 = vsel %vm1436, %v1528, %v1536
        %v1541 = vsub.f32 %v1473, %v1537
        %v1542 = vsub.f32 %v1474, %v1538
        %v1543 = vsub.f32 %v1475, %v1539
        %v1544 = vsub.f32 %v1476, %v1540
        %v1545 = vsel %vm1430, %v1541, 0.0
        %v1546 = vsel %vm1430, %v1542, 0.0
        %v1547 = vsel %vm1430, %v1543, 0.0
        %v1548 = vsel %vm1430, %v1544, 0.0
        %1549 = vst.msk [vmem:[%s212] sm:$0xff] %vm1013, %v1545
        %1550 = vst.msk [vmem:[%s212 + $0x8] sm:$0xff] %vm1013, %v1546
        %1551 = vst.msk [vmem:[%s212 + $0x10] sm:$0xff] %vm1013, %v1547
        %1552 = vst.msk [vmem:[%s212 + $0x18] sm:$0xff] %vm1013, %v1548
        %p1553 = scmp.lt.s32.totalorder %s17, 1
        %s1554 = scalar_select %p1553, %s17, 1
        %s1555 = smul.addr %s1554, 4
        %s1556 = smul.addr %s1555, 8
        %s1557 = scalar_lea.vmem %s3, %s1556
        // Predicated region
        $region37: #{tpu_custom_call.1} parent=31 // pred_check
          %p1558 = pneg %p108
        $region38: #{tpu_custom_call.1} parent=31 // pred_check_branch
          %1560 = sbr.rel (%p1558) target = $region40
        $region39: #{tpu_custom_call.1} parent=31 // pred_region
          _
        $region40: #{tpu_custom_call.1} parent=31 // pred_fallthru
          _
      $region32: #{tpu_custom_call.1} parent=5 // pred_fallthru
        _
      %p1561 = scmp.le.s32.totalorder 2, %s12
      // Predicated region
      $region41: #{tpu_custom_call.1} parent=5 // pred_check
        %p1562 = pneg %p1561
      $region42: #{tpu_custom_call.1} parent=5 // pred_check_branch
        %1564 = sbr.rel (%p1562) target = $region44
      $region43: #{tpu_custom_call.1} parent=5 // pred_region
        %s1565 = ssub.s32 %s12, 2
        // Predicated region
        $region45: #{tpu_custom_call.1} parent=43 // pred_check
          %p1566 = pneg %p114
        $region46: #{tpu_custom_call.1} parent=43 // pred_check_branch
          %1568 = sbr.rel (%p1566) target = $region48
        $region47: #{tpu_custom_call.1} parent=43 // pred_region
          %p1569 = scmp.lt.s32.totalorder %s18, 1
          %s1570 = scalar_select %p1569, %s18, 1
          %s1571 = smul.addr %s1570, 4
          %s1572 = smul.addr %s1571, 8
          %s1573 = scalar_lea.vmem %s3, %s1572
        $region48: #{tpu_custom_call.1} parent=43 // pred_fallthru
          _
      $region44: #{tpu_custom_call.1} parent=5 // pred_fallthru
        _
    $region6: #{tpu_custom_call.1} parent=1 // loop_footer
      %s16 = sadd.s32 1, %s12
    $region7: #{tpu_custom_call.1} parent=1 // loop_footer_branch
      %11 = sbr.rel target = $region3
    $region8: #{tpu_custom_call.1} parent=1 // loop_exit
      _
    %1574 = vsyncpa [#allocation3], 1
    %s1575 = scalar_lea.sflag [#allocation3], 1
    %1576 = vsyncpa %s1575, 1

</llo_original>
